<compile_context>
chip_gen: v7x
topology: tpu7x:2x2x1
jax: 0.10.0
libtpu: 0.0.40
codegen_flags: <defaults>
</compile_context>

<pallas_src>
import functools

import jax
import jax.numpy as jnp
from jax import lax
from jax.experimental import pallas as pl
from jax.experimental.pallas import tpu as pltpu

LN_EPS = 1e-5
BN_EPS = 1e-5
NEG_SLOPE = 0.3


# ============================================================================
# 1. MLPMixer (`projection2`) — fully fused single-kernel forward.
# ============================================================================

def _erf_approx(x):
    """Abramowitz & Stegun 7.1.26 polynomial erf (|err| <= 1.5e-7)."""
    a = jnp.abs(x)
    t = 1.0 / (1.0 + 0.3275911 * a)
    poly = t * (0.254829592
                + t * (-0.284496736
                       + t * (1.421413741
                              + t * (-1.453152027 + t * 1.061405429))))
    e = 1.0 - poly * jnp.exp(-a * a)
    return jnp.where(x >= 0, e, -e)


def _gelu_exact(x):
    """PyTorch nn.GELU() default (erf formulation)."""
    return 0.5 * x * (1.0 + _erf_approx(x * 0.7071067811865476))


def _layer_norm(x, gamma, beta):
    """LayerNorm over the last axis, biased variance, eps=1e-5 (PyTorch)."""
    m = jnp.mean(x, axis=-1, keepdims=True)
    xc = x - m
    var = jnp.mean(xc * xc, axis=-1, keepdims=True)
    return xc * lax.rsqrt(var + LN_EPS) * gamma + beta


def _make_mixer_kernel(depth):
    def kernel(x_ref,
               ln1_g, ln1_b, wt1, bt1, wt2, bt2,
               ln2_g, ln2_b, wc1, bc1, wc2, bc2,
               lnf_g, lnf_b, wh, bh,
               o_ref):
        x = x_ref[0]                                      # (Nc, d_model)
        for d in range(depth):                            # depth=2, unrolled
            # --- token mixing: FF over the patch axis -------------------
            # Keep d_model on the lane axis: h = W @ x (no transposes).
            y = _layer_norm(x, ln1_g[d], ln1_b[d])
            h = jnp.dot(wt1[d], y, preferred_element_type=jnp.float32) + bt1[d]
            h = _gelu_exact(h)                            # (token_dim, d_model)
            x = x + (jnp.dot(wt2[d], h,
                             preferred_element_type=jnp.float32) + bt2[d])
            # --- channel mixing: FF over the feature axis ---------------
            y = _layer_norm(x, ln2_g[d], ln2_b[d])
            h = jnp.dot(y, wc1[d], preferred_element_type=jnp.float32) + bc1[d]
            h = _gelu_exact(h)                            # (Nc, channel_dim)
            x = x + (jnp.dot(h, wc2[d],
                             preferred_element_type=jnp.float32) + bc2[d])
        # --- final LayerNorm + per-token linear head ---------------------
        y = _layer_norm(x, lnf_g[...], lnf_b[...])
        o_ref[0] = jnp.dot(y, wh[...],
                           preferred_element_type=jnp.float32) + bh[...]
    return kernel


def _full_spec(shape):
    nd = len(shape)
    return pl.BlockSpec(shape, lambda i: (0,) * nd)


@jax.jit
def mlp_mixer_forward(x, params):
    """projection2 forward.  x: (B, Nc, d_model); params in PyTorch layouts."""
    b, n_patch, dim = x.shape
    depth = params["wt1"].shape[0]
    n_out = params["wh"].shape[0]
    f32 = jnp.float32

    prepped = [
        params["ln1_g"].astype(f32).reshape(depth, 1, dim),
        params["ln1_b"].astype(f32).reshape(depth, 1, dim),
        params["wt1"].astype(f32),                              # (depth, token_dim, Nc)
        params["bt1"].astype(f32)[:, :, None],                  # (depth, token_dim, 1)
        params["wt2"].astype(f32),                              # (depth, Nc, token_dim)
        params["bt2"].astype(f32)[:, :, None],                  # (depth, Nc, 1)
        params["ln2_g"].astype(f32).reshape(depth, 1, dim),
        params["ln2_b"].astype(f32).reshape(depth, 1, dim),
        jnp.transpose(params["wc1"].astype(f32), (0, 2, 1)),    # (depth, dim, ch_dim)
        params["bc1"].astype(f32)[:, None, :],                  # (depth, 1, ch_dim)
        jnp.transpose(params["wc2"].astype(f32), (0, 2, 1)),    # (depth, ch_dim, dim)
        params["bc2"].astype(f32)[:, None, :],                  # (depth, 1, dim)
        params["lnf_g"].astype(f32).reshape(1, dim),
        params["lnf_b"].astype(f32).reshape(1, dim),
        params["wh"].astype(f32).T,                             # (dim, n_out)
        params["bh"].astype(f32).reshape(1, n_out),
    ]

    in_specs = [pl.BlockSpec((1, n_patch, dim), lambda i: (i, 0, 0))]
    in_specs += [_full_spec(a.shape) for a in prepped]

    return pl.pallas_call(
        _make_mixer_kernel(depth),
        out_shape=jax.ShapeDtypeStruct((b, n_patch, n_out), jnp.float32),
        grid=(b,),
        in_specs=in_specs,
        out_specs=pl.BlockSpec((1, n_patch, n_out), lambda i: (i, 0, 0)),
        compiler_params=pltpu.CompilerParams(dimension_semantics=("parallel",)),
    )(x.astype(f32), *prepped)


def _mixer_reference(x, p):
    """Pure-JAX reference of the PyTorch MLPMixer forward (f32 precision)."""
    hi = lax.Precision.HIGHEST
    gelu = lambda v: jax.nn.gelu(v, approximate=False)

    def ln(v, g, b_):
        m = jnp.mean(v, axis=-1, keepdims=True)
        var = jnp.mean((v - m) ** 2, axis=-1, keepdims=True)
        return (v - m) / jnp.sqrt(var + LN_EPS) * g + b_

    depth = p["wt1"].shape[0]
    for d in range(depth):
        y = ln(x, p["ln1_g"][d], p["ln1_b"][d])
        y = jnp.swapaxes(y, 1, 2)                                   # b d n
        y = gelu(jnp.matmul(y, p["wt1"][d].T, precision=hi) + p["bt1"][d])
        y = jnp.matmul(y, p["wt2"][d].T, precision=hi) + p["bt2"][d]
        y = jnp.swapaxes(y, 1, 2)                                   # b n d
        x = x + y
        y = ln(x, p["ln2_g"][d], p["ln2_b"][d])
        y = gelu(jnp.matmul(y, p["wc1"][d].T, precision=hi) + p["bc1"][d])
        y = jnp.matmul(y, p["wc2"][d].T, precision=hi) + p["bc2"][d]
        x = x + y
    y = ln(x, p["lnf_g"], p["lnf_b"])
    return jnp.matmul(y, p["wh"].T, precision=hi) + p["bh"]


# ============================================================================
# 2. conv_block1: Conv2d(3x3) + BatchNorm2d (batch stats) + LeakyReLU(0.3),
#    fused, lane-dense layout (kept from the previously validated revision).
# ============================================================================

def _make_conv_bn_lrelu_kernel(tap_offsets, inv_m):
    """Kernel closure; tap_offsets are static flat-lane shifts for 3x3 taps."""

    def kernel(x_ref, w_ref, mask_ref, g_ref, b_ref, o_ref):
        c_out, l_out = o_ref.shape

        # Convolution as 9 shift-sliced accumulated matmuls (MXU).
        acc = jnp.zeros((c_out, l_out), jnp.float32)
        for t, off in enumerate(tap_offsets):
            x_tap = x_ref[:, pl.ds(off, l_out)]
            acc = acc + jnp.dot(w_ref[t], x_tap,
                                preferred_element_type=jnp.float32)

        # Training-mode BatchNorm: single-pass masked moments.
        mask = mask_ref[...]                                    # (1, L_out)
        ym = acc * mask
        mean = jnp.sum(ym, axis=1, keepdims=True) * inv_m       # (C_out, 1)
        ex2 = jnp.sum(ym * acc, axis=1, keepdims=True) * inv_m  # E[y^2]
        var = ex2 - mean * mean
        scale = lax.rsqrt(var + BN_EPS) * g_ref[...]
        shift = b_ref[...] - mean * scale
        z = acc * scale + shift                                 # one FMA pass

        # LeakyReLU(0.3)
        o_ref[...] = jnp.maximum(z, NEG_SLOPE * z)

    return kernel


@functools.partial(jax.jit, static_argnames=("stride", "pad", "dila"))
def conv_block1_forward(x_nchw, conv_w, conv_b, bn_gamma, bn_beta,
                        stride=1, pad=1, dila=1):
    """x_nchw: (N, C_in, H, W); conv_w: (C_out, C_in, 3, 3); returns NCHW.

    conv_b is accepted for API parity but unused: a per-channel additive bias
    is exactly cancelled by the training-mode BN mean subtraction.
    """
    del conv_b
    if stride != 1:
        raise NotImplementedError("fused shift-based im2col assumes stride == 1")

    n, c_in, h, w = x_nchw.shape
    c_out, _, kh, kw = conv_w.shape
    hp, wp = h + 2 * pad, w + 2 * pad
    h_out = h + 2 * pad - dila * (kh - 1)
    w_out = w + 2 * pad - dila * (kw - 1)

    off_max = dila * (kh - 1) * wp + dila * (kw - 1)
    xp = jnp.pad(x_nchw.astype(jnp.float32),
                 ((0, 0), (0, 0), (pad, pad), (pad, pad)))
    xp = jnp.transpose(xp, (1, 0, 2, 3)).reshape(c_in, n * hp * wp)
    xp = jnp.pad(xp, ((0, 0), (0, off_max)))
    l_out = n * hp * wp
    tap_offsets = tuple(ky * dila * wp + kx * dila
                        for ky in range(kh) for kx in range(kw))

    w_taps = jnp.transpose(conv_w.astype(jnp.float32),
                           (2, 3, 0, 1)).reshape(kh * kw, c_out, c_in)

    p = jnp.arange(l_out, dtype=jnp.int32)
    rem = p % (hp * wp)
    mask = ((rem // wp < h_out) & (rem % wp < w_out)).astype(jnp.float32)
    mask = mask.reshape(1, l_out)

    g2d = bn_gamma.reshape(c_out, 1).astype(jnp.float32)
    bt2d = bn_beta.reshape(c_out, 1).astype(jnp.float32)
    inv_m = 1.0 / float(n * h_out * w_out)

    vmem = pl.BlockSpec(memory_space=pltpu.MemorySpace.VMEM)
    y = pl.pallas_call(
        _make_conv_bn_lrelu_kernel(tap_offsets, inv_m),
        out_shape=jax.ShapeDtypeStruct((c_out, l_out), jnp.float32),
        in_specs=[vmem, vmem, vmem, vmem, vmem],
        out_specs=vmem,
    )(xp, w_taps, mask, g2d, bt2d)

    y = y.reshape(c_out, n, hp, wp)[:, :, :h_out, :w_out]
    return jnp.transpose(y, (1, 0, 2, 3))


def _conv_reference(x_nchw, conv_w, conv_b, bn_gamma, bn_beta, stride, pad, dila):
    """Pure-JAX reference of the PyTorch conv block (training-mode BN)."""
    y = lax.conv_general_dilated(
        x_nchw.astype(jnp.float32), conv_w.astype(jnp.float32),
        window_strides=(stride, stride),
        padding=((pad, pad), (pad, pad)),
        rhs_dilation=(dila, dila),
        dimension_numbers=("NCHW", "OIHW", "NCHW"),
        precision=lax.Precision.HIGHEST)
    y = y + conv_b.reshape(1, -1, 1, 1)
    mean = jnp.mean(y, axis=(0, 2, 3), keepdims=True)
    var = jnp.mean((y - mean) ** 2, axis=(0, 2, 3), keepdims=True)
    xhat = (y - mean) / jnp.sqrt(var + BN_EPS)
    z = xhat * bn_gamma.reshape(1, -1, 1, 1) + bn_beta.reshape(1, -1, 1, 1)
    return jnp.where(z >= 0, z, NEG_SLOPE * z)


# ============================================================================
# Self-test
# ============================================================================

if __name__ == "__main__":
    root = jax.random.PRNGKey(0)
    k_conv, k_mix = jax.random.split(root)

    # -------- conv_block1: Conv3x3 + BN + LeakyReLU --------
    N, C_IN, C_OUT, H, W = 2, 4, 8, 16, 16
    STRIDE, PAD, DILA = 1, 1, 1
    kx, kw_, kb, kg, kbt = jax.random.split(k_conv, 5)
    x_conv = jax.random.normal(kx, (N, C_IN, H, W), dtype=jnp.float32)
    conv_w = jax.random.normal(kw_, (C_OUT, C_IN, 3, 3), dtype=jnp.float32) * 0.1
    conv_b = jax.random.normal(kb, (C_OUT,), dtype=jnp.float32) * 0.1
    bn_gamma = 1.0 + 0.1 * jax.random.normal(kg, (C_OUT,), dtype=jnp.float32)
    bn_beta = 0.1 * jax.random.normal(kbt, (C_OUT,), dtype=jnp.float32)

    out_c = jax.block_until_ready(conv_block1_forward(
        x_conv, conv_w, conv_b, bn_gamma, bn_beta,
        stride=STRIDE, pad=PAD, dila=DILA))
    ref_c = jax.block_until_ready(_conv_reference(
        x_conv, conv_w, conv_b, bn_gamma, bn_beta, STRIDE, PAD, DILA))
    assert out_c.shape == (N, C_OUT, H, W), out_c.shape
    assert jnp.allclose(out_c, ref_c, rtol=1e-4, atol=1e-4), \
        float(jnp.max(jnp.abs(out_c - ref_c)))

    # -------- projection2: MLPMixer head --------
    # Small DL_BF_TTD instantiation: K=2, RF_chain=2, Nr=2, L=2 -> d_model=32;
    # Nc=8 patches; N_ant=4*4=16 outputs; token_dim=channel_dim=64; depth=2.
    B, NC, DM, NANT, TD, CD, DEPTH = 2, 8, 32, 16, 64, 64, 2
    keys = iter(jax.random.split(k_mix, 32))

    def lin_init(out_f, in_f):
        bound = float(in_f) ** -0.5
        w = jax.random.uniform(next(keys), (out_f, in_f), jnp.float32, -bound, bound)
        b_ = jax.random.uniform(next(keys), (out_f,), jnp.float32, -bound, bound)
        return w, b_

    def ln_init(dim):
        g = 1.0 + 0.1 * jax.random.normal(next(keys), (dim,), dtype=jnp.float32)
        b_ = 0.1 * jax.random.normal(next(keys), (dim,), dtype=jnp.float32)
        return g, b_

    blk = {k: [] for k in ("ln1_g", "ln1_b", "wt1", "bt1", "wt2", "bt2",
                           "ln2_g", "ln2_b", "wc1", "bc1", "wc2", "bc2")}
    for _ in range(DEPTH):
        g, b_ = ln_init(DM); blk["ln1_g"].append(g); blk["ln1_b"].append(b_)
        w, b_ = lin_init(TD, NC); blk["wt1"].append(w); blk["bt1"].append(b_)
        w, b_ = lin_init(NC, TD); blk["wt2"].append(w); blk["bt2"].append(b_)
        g, b_ = ln_init(DM); blk["ln2_g"].append(g); blk["ln2_b"].append(b_)
        w, b_ = lin_init(CD, DM); blk["wc1"].append(w); blk["bc1"].append(b_)
        w, b_ = lin_init(DM, CD); blk["wc2"].append(w); blk["bc2"].append(b_)
    params = {k: jnp.stack(v) for k, v in blk.items()}
    params["lnf_g"], params["lnf_b"] = ln_init(DM)
    params["wh"], params["bh"] = lin_init(NANT, DM)

    x_mix = jax.random.normal(next(keys), (B, NC, DM), dtype=jnp.float32)

    out_m = jax.block_until_ready(mlp_mixer_forward(x_mix, params))
    ref_m = jax.block_until_ready(_mixer_reference(x_mix, params))
    assert out_m.shape == (B, NC, NANT), out_m.shape
    assert jnp.allclose(out_m, ref_m, rtol=5e-4, atol=5e-4), \
        float(jnp.max(jnp.abs(out_m - ref_m)))

    print("KERNEL_OK")
</pallas_src>

<mosaic_0001>
module attributes {stable_mosaic.version = 11 : i64} {
  func.func @kernel(%arg0: memref<4x686xf32, #tpu.memory_space<vmem>>, %arg1: memref<9x8x4xf32, #tpu.memory_space<vmem>>, %arg2: memref<1x648xf32, #tpu.memory_space<vmem>>, %arg3: memref<8x1xf32, #tpu.memory_space<vmem>>, %arg4: memref<8x1xf32, #tpu.memory_space<vmem>>, %arg5: memref<8x648xf32, #tpu.memory_space<vmem>>) attributes {dimension_semantics = [], scalar_prefetch = 0 : i64, scratch_operands = 0 : i64, tpu.core_type = #tpu.core_type<tc>} {
    %cst = arith.constant 0.000000e+00 : f32
    %0 = vector.broadcast %cst : f32 to vector<8x648xf32>
    %c0 = arith.constant 0 : index
    %c0_0 = arith.constant 0 : index
    %1 = vector.load %arg0[%c0, %c0_0] : memref<4x686xf32, #tpu.memory_space<vmem>>, vector<4x648xf32>
    %c0_1 = arith.constant 0 : index
    %c0_2 = arith.constant 0 : index
    %c0_3 = arith.constant 0 : index
    %2 = vector.load %arg1[%c0_1, %c0_2, %c0_3] : memref<9x8x4xf32, #tpu.memory_space<vmem>>, vector<1x8x4xf32>
    %3 = vector.shape_cast %2 : vector<1x8x4xf32> to vector<8x4xf32>
    %cst_4 = arith.constant dense<0.000000e+00> : vector<8x648xf32>
    %4 = tpu.matmul %3, %1, %cst_4 {dimension_numbers = #tpu.dot_dimension_numbers<[1], [0], [0], [1], [0, 0, 1, 1], [], []>} : vector<8x4xf32>, vector<4x648xf32>, vector<8x648xf32> -> vector<8x648xf32>
    %5 = arith.addf %0, %4 : vector<8x648xf32>
    %c0_5 = arith.constant 0 : index
    %c1 = arith.constant 1 : index
    %6 = vector.load %arg0[%c0_5, %c1] : memref<4x686xf32, #tpu.memory_space<vmem>>, vector<4x648xf32>
    %c1_6 = arith.constant 1 : index
    %c0_7 = arith.constant 0 : index
    %c0_8 = arith.constant 0 : index
    %7 = vector.load %arg1[%c1_6, %c0_7, %c0_8] : memref<9x8x4xf32, #tpu.memory_space<vmem>>, vector<1x8x4xf32>
    %8 = vector.shape_cast %7 : vector<1x8x4xf32> to vector<8x4xf32>
    %cst_9 = arith.constant dense<0.000000e+00> : vector<8x648xf32>
    %9 = tpu.matmul %8, %6, %cst_9 {dimension_numbers = #tpu.dot_dimension_numbers<[1], [0], [0], [1], [0, 0, 1, 1], [], []>} : vector<8x4xf32>, vector<4x648xf32>, vector<8x648xf32> -> vector<8x648xf32>
    %10 = arith.addf %5, %9 : vector<8x648xf32>
    %c0_10 = arith.constant 0 : index
    %c2 = arith.constant 2 : index
    %11 = vector.load %arg0[%c0_10, %c2] : memref<4x686xf32, #tpu.memory_space<vmem>>, vector<4x648xf32>
    %c2_11 = arith.constant 2 : index
    %c0_12 = arith.constant 0 : index
    %c0_13 = arith.constant 0 : index
    %12 = vector.load %arg1[%c2_11, %c0_12, %c0_13] : memref<9x8x4xf32, #tpu.memory_space<vmem>>, vector<1x8x4xf32>
    %13 = vector.shape_cast %12 : vector<1x8x4xf32> to vector<8x4xf32>
    %cst_14 = arith.constant dense<0.000000e+00> : vector<8x648xf32>
    %14 = tpu.matmul %13, %11, %cst_14 {dimension_numbers = #tpu.dot_dimension_numbers<[1], [0], [0], [1], [0, 0, 1, 1], [], []>} : vector<8x4xf32>, vector<4x648xf32>, vector<8x648xf32> -> vector<8x648xf32>
    %15 = arith.addf %10, %14 : vector<8x648xf32>
    %c0_15 = arith.constant 0 : index
    %c18 = arith.constant 18 : index
    %16 = vector.load %arg0[%c0_15, %c18] : memref<4x686xf32, #tpu.memory_space<vmem>>, vector<4x648xf32>
    %c3 = arith.constant 3 : index
    %c0_16 = arith.constant 0 : index
    %c0_17 = arith.constant 0 : index
    %17 = vector.load %arg1[%c3, %c0_16, %c0_17] : memref<9x8x4xf32, #tpu.memory_space<vmem>>, vector<1x8x4xf32>
    %18 = vector.shape_cast %17 : vector<1x8x4xf32> to vector<8x4xf32>
    %cst_18 = arith.constant dense<0.000000e+00> : vector<8x648xf32>
    %19 = tpu.matmul %18, %16, %cst_18 {dimension_numbers = #tpu.dot_dimension_numbers<[1], [0], [0], [1], [0, 0, 1, 1], [], []>} : vector<8x4xf32>, vector<4x648xf32>, vector<8x648xf32> -> vector<8x648xf32>
    %20 = arith.addf %15, %19 : vector<8x648xf32>
    %c0_19 = arith.constant 0 : index
    %c19 = arith.constant 19 : index
    %21 = vector.load %arg0[%c0_19, %c19] : memref<4x686xf32, #tpu.memory_space<vmem>>, vector<4x648xf32>
    %c4 = arith.constant 4 : index
    %c0_20 = arith.constant 0 : index
    %c0_21 = arith.constant 0 : index
    %22 = vector.load %arg1[%c4, %c0_20, %c0_21] : memref<9x8x4xf32, #tpu.memory_space<vmem>>, vector<1x8x4xf32>
    %23 = vector.shape_cast %22 : vector<1x8x4xf32> to vector<8x4xf32>
    %cst_22 = arith.constant dense<0.000000e+00> : vector<8x648xf32>
    %24 = tpu.matmul %23, %21, %cst_22 {dimension_numbers = #tpu.dot_dimension_numbers<[1], [0], [0], [1], [0, 0, 1, 1], [], []>} : vector<8x4xf32>, vector<4x648xf32>, vector<8x648xf32> -> vector<8x648xf32>
    %25 = arith.addf %20, %24 : vector<8x648xf32>
    %c0_23 = arith.constant 0 : index
    %c20 = arith.constant 20 : index
    %26 = vector.load %arg0[%c0_23, %c20] : memref<4x686xf32, #tpu.memory_space<vmem>>, vector<4x648xf32>
    %c5 = arith.constant 5 : index
    %c0_24 = arith.constant 0 : index
    %c0_25 = arith.constant 0 : index
    %27 = vector.load %arg1[%c5, %c0_24, %c0_25] : memref<9x8x4xf32, #tpu.memory_space<vmem>>, vector<1x8x4xf32>
    %28 = vector.shape_cast %27 : vector<1x8x4xf32> to vector<8x4xf32>
    %cst_26 = arith.constant dense<0.000000e+00> : vector<8x648xf32>
    %29 = tpu.matmul %28, %26, %cst_26 {dimension_numbers = #tpu.dot_dimension_numbers<[1], [0], [0], [1], [0, 0, 1, 1], [], []>} : vector<8x4xf32>, vector<4x648xf32>, vector<8x648xf32> -> vector<8x648xf32>
    %30 = arith.addf %25, %29 : vector<8x648xf32>
    %c0_27 = arith.constant 0 : index
    %c36 = arith.constant 36 : index
    %31 = vector.load %arg0[%c0_27, %c36] : memref<4x686xf32, #tpu.memory_space<vmem>>, vector<4x648xf32>
    %c6 = arith.constant 6 : index
    %c0_28 = arith.constant 0 : index
    %c0_29 = arith.constant 0 : index
    %32 = vector.load %arg1[%c6, %c0_28, %c0_29] : memref<9x8x4xf32, #tpu.memory_space<vmem>>, vector<1x8x4xf32>
    %33 = vector.shape_cast %32 : vector<1x8x4xf32> to vector<8x4xf32>
    %cst_30 = arith.constant dense<0.000000e+00> : vector<8x648xf32>
    %34 = tpu.matmul %33, %31, %cst_30 {dimension_numbers = #tpu.dot_dimension_numbers<[1], [0], [0], [1], [0, 0, 1, 1], [], []>} : vector<8x4xf32>, vector<4x648xf32>, vector<8x648xf32> -> vector<8x648xf32>
    %35 = arith.addf %30, %34 : vector<8x648xf32>
    %c0_31 = arith.constant 0 : index
    %c37 = arith.constant 37 : index
    %36 = vector.load %arg0[%c0_31, %c37] : memref<4x686xf32, #tpu.memory_space<vmem>>, vector<4x648xf32>
    %c7 = arith.constant 7 : index
    %c0_32 = arith.constant 0 : index
    %c0_33 = arith.constant 0 : index
    %37 = vector.load %arg1[%c7, %c0_32, %c0_33] : memref<9x8x4xf32, #tpu.memory_space<vmem>>, vector<1x8x4xf32>
    %38 = vector.shape_cast %37 : vector<1x8x4xf32> to vector<8x4xf32>
    %cst_34 = arith.constant dense<0.000000e+00> : vector<8x648xf32>
    %39 = tpu.matmul %38, %36, %cst_34 {dimension_numbers = #tpu.dot_dimension_numbers<[1], [0], [0], [1], [0, 0, 1, 1], [], []>} : vector<8x4xf32>, vector<4x648xf32>, vector<8x648xf32> -> vector<8x648xf32>
    %40 = arith.addf %35, %39 : vector<8x648xf32>
    %c0_35 = arith.constant 0 : index
    %c38 = arith.constant 38 : index
    %41 = vector.load %arg0[%c0_35, %c38] : memref<4x686xf32, #tpu.memory_space<vmem>>, vector<4x648xf32>
    %c8 = arith.constant 8 : index
    %c0_36 = arith.constant 0 : index
    %c0_37 = arith.constant 0 : index
    %42 = vector.load %arg1[%c8, %c0_36, %c0_37] : memref<9x8x4xf32, #tpu.memory_space<vmem>>, vector<1x8x4xf32>
    %43 = vector.shape_cast %42 : vector<1x8x4xf32> to vector<8x4xf32>
    %cst_38 = arith.constant dense<0.000000e+00> : vector<8x648xf32>
    %44 = tpu.matmul %43, %41, %cst_38 {dimension_numbers = #tpu.dot_dimension_numbers<[1], [0], [0], [1], [0, 0, 1, 1], [], []>} : vector<8x4xf32>, vector<4x648xf32>, vector<8x648xf32> -> vector<8x648xf32>
    %45 = arith.addf %40, %44 : vector<8x648xf32>
    %c0_39 = arith.constant 0 : index
    %c0_40 = arith.constant 0 : index
    %46 = vector.load %arg2[%c0_39, %c0_40] : memref<1x648xf32, #tpu.memory_space<vmem>>, vector<1x648xf32>
    %47 = vector.broadcast %46 : vector<1x648xf32> to vector<8x648xf32>
    %48 = arith.mulf %45, %47 : vector<8x648xf32>
    %cst_41 = arith.constant dense<0.000000e+00> : vector<8xf32>
    %49 = vector.multi_reduction <add>, %48, %cst_41 [1] : vector<8x648xf32> to vector<8xf32>
    %50 = vector.shape_cast %49 : vector<8xf32> to vector<8x1xf32>
    %cst_42 = arith.constant 0.001953125 : f32
    %51 = vector.broadcast %cst_42 : f32 to vector<8x1xf32>
    %52 = arith.mulf %50, %51 : vector<8x1xf32>
    %53 = arith.mulf %48, %45 : vector<8x648xf32>
    %cst_43 = arith.constant dense<0.000000e+00> : vector<8xf32>
    %54 = vector.multi_reduction <add>, %53, %cst_43 [1] : vector<8x648xf32> to vector<8xf32>
    %55 = vector.shape_cast %54 : vector<8xf32> to vector<8x1xf32>
    %cst_44 = arith.constant 0.001953125 : f32
    %56 = vector.broadcast %cst_44 : f32 to vector<8x1xf32>
    %57 = arith.mulf %55, %56 : vector<8x1xf32>
    %58 = arith.mulf %52, %52 : vector<8x1xf32>
    %59 = arith.subf %57, %58 : vector<8x1xf32>
    %cst_45 = arith.constant 9.99999974E-6 : f32
    %60 = vector.broadcast %cst_45 : f32 to vector<8x1xf32>
    %61 = arith.addf %59, %60 : vector<8x1xf32>
    %62 = math.rsqrt %61 : vector<8x1xf32>
    %c0_46 = arith.constant 0 : index
    %c0_47 = arith.constant 0 : index
    %63 = vector.load %arg3[%c0_46, %c0_47] : memref<8x1xf32, #tpu.memory_space<vmem>>, vector<8x1xf32>
    %64 = arith.mulf %62, %63 : vector<8x1xf32>
    %c0_48 = arith.constant 0 : index
    %c0_49 = arith.constant 0 : index
    %65 = vector.load %arg4[%c0_48, %c0_49] : memref<8x1xf32, #tpu.memory_space<vmem>>, vector<8x1xf32>
    %66 = arith.mulf %52, %64 : vector<8x1xf32>
    %67 = arith.subf %65, %66 : vector<8x1xf32>
    %68 = vector.broadcast %64 : vector<8x1xf32> to vector<8x648xf32>
    %69 = arith.mulf %45, %68 : vector<8x648xf32>
    %70 = vector.broadcast %67 : vector<8x1xf32> to vector<8x648xf32>
    %71 = arith.addf %69, %70 : vector<8x648xf32>
    %cst_50 = arith.constant 3.000000e-01 : f32
    %72 = vector.broadcast %cst_50 : f32 to vector<8x648xf32>
    %73 = arith.mulf %72, %71 : vector<8x648xf32>
    %74 = arith.maximumf %71, %73 : vector<8x648xf32>
    %c0_51 = arith.constant 0 : index
    %c0_52 = arith.constant 0 : index
    %75 = vector.load %arg5[%c0_51, %c0_52] : memref<8x648xf32, #tpu.memory_space<vmem>>, vector<8x648xf32>
    tpu.vector_store %arg5[%c0_51, %c0_52], %74 {strides = array<i32>} : memref<8x648xf32, #tpu.memory_space<vmem>>, vector<8x648xf32>,
    return
  }
}

</mosaic_0001>

<llo_original>
// kernel: conv_block1_forward.1
$region0: #{conv_block1_forward.1}
  #allocation0 [shape = 'u32[]', space=smem, size = 0x4, offset = 0x4, fixed_abs, tag = 'smem constant byte address 0x4 - core index']
  #allocation1 [shape = 'u32[144,128]{1,0:T(1,128)}', space=vmem, size = 0x12000, scoped, tag = 'internal scratch']
  %s0 = inlined_call_operand.vmem [shape: f32[4,686], index: 0, kind: input, shape index: {}]
  %s1 = inlined_call_operand.vmem [shape: f32[9,8,4], index: 1, kind: input, shape index: {}]
  %s2 = inlined_call_operand.vmem [shape: f32[1,648], index: 2, kind: input, shape index: {}]
  %s3 = inlined_call_operand.vmem [shape: f32[8,1], index: 3, kind: input, shape index: {}]
  %s4 = inlined_call_operand.vmem [shape: f32[8,1], index: 4, kind: input, shape index: {}]
  %s5 = inlined_call_operand.vmem [shape: f32[8,648], index: 5, kind: output, shape index: {}]
  %s6 = sld [smem:[#allocation0]]
  $region30: #{conv_block1_forward.1} parent=0
    _
  %s8 = ssub.s32 1, %s6
  %s9 = scalar_select 0, %s8, %s6
  // Predicated region
  $region2: #{conv_block1_forward.1} parent=0 // pred_check
    _
  $region3: #{conv_block1_forward.1} parent=0 // pred_check_branch
    %11 = sbr.rel (0) target = $region5
  $region4: #{conv_block1_forward.1} parent=0 // pred_region
    _
  $region5: #{conv_block1_forward.1} parent=0 // pred_fallthru
    _
  // Predicated region
  $region6: #{conv_block1_forward.1} parent=0 // pred_check
    _
  $region7: #{conv_block1_forward.1} parent=0 // pred_check_branch
    %13 = sbr.rel (0) target = $region9
  $region8: #{conv_block1_forward.1} parent=0 // pred_region
    _
  $region9: #{conv_block1_forward.1} parent=0 // pred_fallthru
    _
  // Predicated region
  $region10: #{conv_block1_forward.1} parent=0 // pred_check
    _
  $region11: #{conv_block1_forward.1} parent=0 // pred_check_branch
    %15 = sbr.rel (0) target = $region13
  $region12: #{conv_block1_forward.1} parent=0 // pred_region
    _
  $region13: #{conv_block1_forward.1} parent=0 // pred_fallthru
    _
  // Predicated region
  $region14: #{conv_block1_forward.1} parent=0 // pred_check
    _
  $region15: #{conv_block1_forward.1} parent=0 // pred_check_branch
    %17 = sbr.rel (0) target = $region17
  $region16: #{conv_block1_forward.1} parent=0 // pred_region
    _
  $region17: #{conv_block1_forward.1} parent=0 // pred_fallthru
    _
  // Predicated region
  $region18: #{conv_block1_forward.1} parent=0 // pred_check
    _
  $region19: #{conv_block1_forward.1} parent=0 // pred_check_branch
    %19 = sbr.rel (0) target = $region21
  $region20: #{conv_block1_forward.1} parent=0 // pred_region
    _
  $region21: #{conv_block1_forward.1} parent=0 // pred_fallthru
    _
  %v20 = vld [vmem:[%s0] sm:$0xff]
  %v21 = vld [vmem:[%s0 + $0x8] sm:$0xff]
  %v22 = vld [vmem:[%s0 + $0x10] sm:$0xff]
  %v23 = vld [vmem:[%s1] sm:$0xff]
  %s24 = scalar_lea.vmem %s1, 8
  %v25 = vld [vmem:[%s24] sm:$0xff]
  %v29 = vcombine.high %v20, %v20
  %v30 = vcombine.high %v21, %v21
  %v31 = vcombine.high %v22, %v22
  %32 = vrot.lane.b32.xlu0 %v20, 127
  %v33 = vpop.permute.xlu0 %32
  %34 = vrot.lane.b32.xlu0 %v29, 127
  %v35 = vpop.permute.xlu0 %34
  %36 = vrot.lane.b32.xlu0 %v21, 127
  %v37 = vpop.permute.xlu0 %36
  %38 = vrot.lane.b32.xlu0 %v30, 127
  %v39 = vpop.permute.xlu0 %38
  %40 = vrot.lane.b32.xlu0 %v22, 127
  %v41 = vpop.permute.xlu0 %40
  %42 = vrot.lane.b32.xlu0 %v31, 127
  %v43 = vpop.permute.xlu0 %42
  %vm44 = vcmask 1039360
  %v45 = vsel %vm44, %v33, %v35
  %v46 = vsel %vm44, %v35, %v37
  %v47 = vsel %vm44, %v37, %v39
  %v48 = vsel %vm44, %v39, %v41
  %v49 = vsel %vm44, %v41, %v43
  %vm50 = vcmask 31744
  %v52 = vsel %vm50, %v25, 0
  %vm54 = vcmask 1043456
  %v55 = vsel %vm54, %v45, 0
  %v57 = vsel %vm54, %v46, 0
  %v59 = vsel %vm54, %v47, 0
  %v61 = vsel %vm54, %v48, 0
  %v63 = vsel %vm54, %v49, 0
  %v65 = vsel %vm54, %v43, 0
  %67 = vmatprep.subr.mxu0 %v57
  %68 = vmatpush1.msra.mxu0 %v55
  %69 = vmatprep.subr.mxu0 0.0
  %70 = vmatpush1.msra.mxu0 0.0
  %71 = vmatprep.subr.mxu0 0.0
  %72 = vmatpush1.msra.mxu0 0.0
  %73 = vmatprep.subr.mxu0 0.0
  %74 = vmatpush1.msra.mxu0 0.0
  %75 = vmatprep.subr.mxu0 0.0
  %76 = vmatpush1.msra.mxu0 0.0
  %77 = vmatprep.subr.mxu0 0.0
  %78 = vmatpush1.msra.mxu0 0.0
  %79 = vmatprep.subr.mxu0 0.0
  %80 = vmatpush1.msra.mxu0 0.0
  %81 = vmatprep.subr.mxu0 0.0
  %82 = vmatpush1.msra.mxu0 0.0
  %83 = vmatprep.subr.mxu0 0.0
  %84 = vmatpush1.msra.mxu0 0.0
  %85 = vmatprep.subr.mxu0 0.0
  %86 = vmatpush1.msra.mxu0 0.0
  %87 = vmatprep.subr.mxu0 0.0
  %88 = vmatpush1.msra.mxu0 0.0
  %89 = vmatprep.subr.mxu0 0.0
  %90 = vmatpush1.msra.mxu0 0.0
  %91 = vmatprep.subr.mxu0 0.0
  %92 = vmatpush1.msra.mxu0 0.0
  %93 = vmatprep.subr.mxu0 0.0
  %94 = vmatpush1.msra.mxu0 0.0
  %95 = vmatprep.subr.mxu0 0.0
  %96 = vmatpush1.msra.mxu0 0.0
  %97 = vmatprep.subr.mxu0 0.0
  %98 = vmatpush1.msra.mxu0 0.0
  %99 = vmatprep.subr.mxu0 0.0
  %100 = vmatpush1.msra.mxu0 0.0
  %101 = vmatprep.subr.mxu0 0.0
  %102 = vmatpush1.msra.mxu0 0.0
  %103 = vmatprep.subr.mxu0 0.0
  %104 = vmatpush1.msra.mxu0 0.0
  %105 = vmatprep.subr.mxu0 0.0
  %106 = vmatpush1.msra.mxu0 0.0
  %107 = vmatprep.subr.mxu0 0.0
  %108 = vmatpush1.msra.mxu0 0.0
  %109 = vmatprep.subr.mxu0 0.0
  %110 = vmatpush1.msra.mxu0 0.0
  %111 = vmatprep.subr.mxu0 0.0
  %112 = vmatpush1.msra.mxu0 0.0
  %113 = vmatprep.subr.mxu0 0.0
  %114 = vmatpush1.msra.mxu0 0.0
  %115 = vmatprep.subr.mxu0 0.0
  %116 = vmatpush1.msra.mxu0 0.0
  %117 = vmatprep.subr.mxu0 0.0
  %118 = vmatpush1.msra.mxu0 0.0
  %119 = vmatprep.subr.mxu0 0.0
  %120 = vmatpush1.msra.mxu0 0.0
  %121 = vmatprep.subr.mxu0 0.0
  %122 = vmatpush1.msra.mxu0 0.0
  %123 = vmatprep.subr.mxu0 0.0
  %124 = vmatpush1.msra.mxu0 0.0
  %125 = vmatprep.subr.mxu0 0.0
  %126 = vmatpush1.msra.mxu0 0.0
  %127 = vmatprep.subr.mxu0 0.0
  %128 = vmatpush1.msra.mxu0 0.0
  %129 = vmatprep.subr.mxu0 0.0
  %130 = vmatpush1.msra.mxu0 0.0
  %131 = vmatprep.mubr.f32.mxu0 0.0
  %132 = vmatmul.mubr.f32.gmra.mrb[0].mxu0 %v52
  %v133 = vpop.f32.mrb[0].mxu0
  %v134 = vadd.f32 0.0, %v133
  %v135 = vpop.f32.mrb[0].mxu0
  %v136 = vadd.f32 0.0, %v135
  %137 = vdwg.mxu0
  %138 = vmatprep.subr.mxu0 %v61
  %139 = vmatpush1.msra.mxu0 %v59
  %140 = vmatprep.subr.mxu0 0.0
  %141 = vmatpush1.msra.mxu0 0.0
  %142 = vmatprep.subr.mxu0 0.0
  %143 = vmatpush1.msra.mxu0 0.0
  %144 = vmatprep.subr.mxu0 0.0
  %145 = vmatpush1.msra.mxu0 0.0
  %146 = vmatprep.subr.mxu0 0.0
  %147 = vmatpush1.msra.mxu0 0.0
  %148 = vmatprep.subr.mxu0 0.0
  %149 = vmatpush1.msra.mxu0 0.0
  %150 = vmatprep.subr.mxu0 0.0
  %151 = vmatpush1.msra.mxu0 0.0
  %152 = vmatprep.subr.mxu0 0.0
  %153 = vmatpush1.msra.mxu0 0.0
  %154 = vmatprep.subr.mxu0 0.0
  %155 = vmatpush1.msra.mxu0 0.0
  %156 = vmatprep.subr.mxu0 0.0
  %157 = vmatpush1.msra.mxu0 0.0
  %158 = vmatprep.subr.mxu0 0.0
  %159 = vmatpush1.msra.mxu0 0.0
  %160 = vmatprep.subr.mxu0 0.0
  %161 = vmatpush1.msra.mxu0 0.0
  %162 = vmatprep.subr.mxu0 0.0
  %163 = vmatpush1.msra.mxu0 0.0
  %164 = vmatprep.subr.mxu0 0.0
  %165 = vmatpush1.msra.mxu0 0.0
  %166 = vmatprep.subr.mxu0 0.0
  %167 = vmatpush1.msra.mxu0 0.0
  %168 = vmatprep.subr.mxu0 0.0
  %169 = vmatpush1.msra.mxu0 0.0
  %170 = vmatprep.subr.mxu0 0.0
  %171 = vmatpush1.msra.mxu0 0.0
  %172 = vmatprep.subr.mxu0 0.0
  %173 = vmatpush1.msra.mxu0 0.0
  %174 = vmatprep.subr.mxu0 0.0
  %175 = vmatpush1.msra.mxu0 0.0
  %176 = vmatprep.subr.mxu0 0.0
  %177 = vmatpush1.msra.mxu0 0.0
  %178 = vmatprep.subr.mxu0 0.0
  %179 = vmatpush1.msra.mxu0 0.0
  %180 = vmatprep.subr.mxu0 0.0
  %181 = vmatpush1.msra.mxu0 0.0
  %182 = vmatprep.subr.mxu0 0.0
  %183 = vmatpush1.msra.mxu0 0.0
  %184 = vmatprep.subr.mxu0 0.0
  %185 = vmatpush1.msra.mxu0 0.0
  %186 = vmatprep.subr.mxu0 0.0
  %187 = vmatpush1.msra.mxu0 0.0
  %188 = vmatprep.subr.mxu0 0.0
  %189 = vmatpush1.msra.mxu0 0.0
  %190 = vmatprep.subr.mxu0 0.0
  %191 = vmatpush1.msra.mxu0 0.0
  %192 = vmatprep.subr.mxu0 0.0
  %193 = vmatpush1.msra.mxu0 0.0
  %194 = vmatprep.subr.mxu0 0.0
  %195 = vmatpush1.msra.mxu0 0.0
  %196 = vmatprep.subr.mxu0 0.0
  %197 = vmatpush1.msra.mxu0 0.0
  %198 = vmatprep.subr.mxu0 0.0
  %199 = vmatpush1.msra.mxu0 0.0
  %200 = vmatprep.subr.mxu0 0.0
  %201 = vmatpush1.msra.mxu0 0.0
  %202 = vmatprep.mubr.f32.mxu0 0.0
  %203 = vmatmul.mubr.f32.gmra.mrb[0].mxu0 %v52
  %v204 = vpop.f32.mrb[0].mxu0
  %v205 = vadd.f32 0.0, %v204
  %v206 = vpop.f32.mrb[0].mxu0
  %v207 = vadd.f32 0.0, %v206
  %208 = vdwg.mxu0
  %209 = vmatprep.subr.mxu0 %v65
  %210 = vmatpush1.msra.mxu0 %v63
  %211 = vmatprep.subr.mxu0 0.0
  %212 = vmatpush1.msra.mxu0 0.0
  %213 = vmatprep.subr.mxu0 0.0
  %214 = vmatpush1.msra.mxu0 0.0
  %215 = vmatprep.subr.mxu0 0.0
  %216 = vmatpush1.msra.mxu0 0.0
  %217 = vmatprep.subr.mxu0 0.0
  %218 = vmatpush1.msra.mxu0 0.0
  %219 = vmatprep.subr.mxu0 0.0
  %220 = vmatpush1.msra.mxu0 0.0
  %221 = vmatprep.subr.mxu0 0.0
  %222 = vmatpush1.msra.mxu0 0.0
  %223 = vmatprep.subr.mxu0 0.0
  %224 = vmatpush1.msra.mxu0 0.0
  %225 = vmatprep.subr.mxu0 0.0
  %226 = vmatpush1.msra.mxu0 0.0
  %227 = vmatprep.subr.mxu0 0.0
  %228 = vmatpush1.msra.mxu0 0.0
  %229 = vmatprep.subr.mxu0 0.0
  %230 = vmatpush1.msra.mxu0 0.0
  %231 = vmatprep.subr.mxu0 0.0
  %232 = vmatpush1.msra.mxu0 0.0
  %233 = vmatprep.subr.mxu0 0.0
  %234 = vmatpush1.msra.mxu0 0.0
  %235 = vmatprep.subr.mxu0 0.0
  %236 = vmatpush1.msra.mxu0 0.0
  %237 = vmatprep.subr.mxu0 0.0
  %238 = vmatpush1.msra.mxu0 0.0
  %239 = vmatprep.subr.mxu0 0.0
  %240 = vmatpush1.msra.mxu0 0.0
  %241 = vmatprep.subr.mxu0 0.0
  %242 = vmatpush1.msra.mxu0 0.0
  %243 = vmatprep.subr.mxu0 0.0
  %244 = vmatpush1.msra.mxu0 0.0
  %245 = vmatprep.subr.mxu0 0.0
  %246 = vmatpush1.msra.mxu0 0.0
  %247 = vmatprep.subr.mxu0 0.0
  %248 = vmatpush1.msra.mxu0 0.0
  %249 = vmatprep.subr.mxu0 0.0
  %250 = vmatpush1.msra.mxu0 0.0
  %251 = vmatprep.subr.mxu0 0.0
  %252 = vmatpush1.msra.mxu0 0.0
  %253 = vmatprep.subr.mxu0 0.0
  %254 = vmatpush1.msra.mxu0 0.0
  %255 = vmatprep.subr.mxu0 0.0
  %256 = vmatpush1.msra.mxu0 0.0
  %257 = vmatprep.subr.mxu0 0.0
  %258 = vmatpush1.msra.mxu0 0.0
  %259 = vmatprep.subr.mxu0 0.0
  %260 = vmatpush1.msra.mxu0 0.0
  %261 = vmatprep.subr.mxu0 0.0
  %262 = vmatpush1.msra.mxu0 0.0
  %263 = vmatprep.subr.mxu0 0.0
  %264 = vmatpush1.msra.mxu0 0.0
  %265 = vmatprep.subr.mxu0 0.0
  %266 = vmatpush1.msra.mxu0 0.0
  %267 = vmatprep.subr.mxu0 0.0
  %268 = vmatpush1.msra.mxu0 0.0
  %269 = vmatprep.subr.mxu0 0.0
  %270 = vmatpush1.msra.mxu0 0.0
  %271 = vmatprep.subr.mxu0 0.0
  %272 = vmatpush1.msra.mxu0 0.0
  %273 = vmatprep.mubr.f32.mxu0 0.0
  %274 = vmatmul.mubr.f32.gmra.mrb[0].mxu0 %v52
  %v275 = vpop.f32.mrb[0].mxu0
  %v276 = vadd.f32 0.0, %v275
  %v277 = vpop.f32.mrb[0].mxu0
  %v278 = vadd.f32 0.0, %v277
  %279 = vdwg.mxu0
  %v281 = vsel %vm50, %v23, 0
  %v283 = vsel %vm54, %v20, 0
  %v285 = vsel %vm54, %v29, 0
  %v287 = vsel %vm54, %v21, 0
  %v289 = vsel %vm54, %v30, 0
  %v291 = vsel %vm54, %v22, 0
  %v293 = vsel %vm54, %v31, 0
  %295 = vmatprep.subr.mxu0 %v285
  %296 = vmatpush1.msra.mxu0 %v283
  %297 = vmatprep.subr.mxu0 0.0
  %298 = vmatpush1.msra.mxu0 0.0
  %299 = vmatprep.subr.mxu0 0.0
  %300 = vmatpush1.msra.mxu0 0.0
  %301 = vmatprep.subr.mxu0 0.0
  %302 = vmatpush1.msra.mxu0 0.0
  %303 = vmatprep.subr.mxu0 0.0
  %304 = vmatpush1.msra.mxu0 0.0
  %305 = vmatprep.subr.mxu0 0.0
  %306 = vmatpush1.msra.mxu0 0.0
  %307 = vmatprep.subr.mxu0 0.0
  %308 = vmatpush1.msra.mxu0 0.0
  %309 = vmatprep.subr.mxu0 0.0
  %310 = vmatpush1.msra.mxu0 0.0
  %311 = vmatprep.subr.mxu0 0.0
  %312 = vmatpush1.msra.mxu0 0.0
  %313 = vmatprep.subr.mxu0 0.0
  %314 = vmatpush1.msra.mxu0 0.0
  %315 = vmatprep.subr.mxu0 0.0
  %316 = vmatpush1.msra.mxu0 0.0
  %317 = vmatprep.subr.mxu0 0.0
  %318 = vmatpush1.msra.mxu0 0.0
  %319 = vmatprep.subr.mxu0 0.0
  %320 = vmatpush1.msra.mxu0 0.0
  %321 = vmatprep.subr.mxu0 0.0
  %322 = vmatpush1.msra.mxu0 0.0
  %323 = vmatprep.subr.mxu0 0.0
  %324 = vmatpush1.msra.mxu0 0.0
  %325 = vmatprep.subr.mxu0 0.0
  %326 = vmatpush1.msra.mxu0 0.0
  %327 = vmatprep.subr.mxu0 0.0
  %328 = vmatpush1.msra.mxu0 0.0
  %329 = vmatprep.subr.mxu0 0.0
  %330 = vmatpush1.msra.mxu0 0.0
  %331 = vmatprep.subr.mxu0 0.0
  %332 = vmatpush1.msra.mxu0 0.0
  %333 = vmatprep.subr.mxu0 0.0
  %334 = vmatpush1.msra.mxu0 0.0
  %335 = vmatprep.subr.mxu0 0.0
  %336 = vmatpush1.msra.mxu0 0.0
  %337 = vmatprep.subr.mxu0 0.0
  %338 = vmatpush1.msra.mxu0 0.0
  %339 = vmatprep.subr.mxu0 0.0
  %340 = vmatpush1.msra.mxu0 0.0
  %341 = vmatprep.subr.mxu0 0.0
  %342 = vmatpush1.msra.mxu0 0.0
  %343 = vmatprep.subr.mxu0 0.0
  %344 = vmatpush1.msra.mxu0 0.0
  %345 = vmatprep.subr.mxu0 0.0
  %346 = vmatpush1.msra.mxu0 0.0
  %347 = vmatprep.subr.mxu0 0.0
  %348 = vmatpush1.msra.mxu0 0.0
  %349 = vmatprep.subr.mxu0 0.0
  %350 = vmatpush1.msra.mxu0 0.0
  %351 = vmatprep.subr.mxu0 0.0
  %352 = vmatpush1.msra.mxu0 0.0
  %353 = vmatprep.subr.mxu0 0.0
  %354 = vmatpush1.msra.mxu0 0.0
  %355 = vmatprep.subr.mxu0 0.0
  %356 = vmatpush1.msra.mxu0 0.0
  %357 = vmatprep.subr.mxu0 0.0
  %358 = vmatpush1.msra.mxu0 0.0
  %359 = vmatprep.mubr.f32.mxu0 0.0
  %360 = vmatmul.mubr.f32.gmra.mrb[0].mxu0 %v281
  %v361 = vpop.f32.mrb[0].mxu0
  %v362 = vadd.f32 %v134, %v361
  %v363 = vpop.f32.mrb[0].mxu0
  %v364 = vadd.f32 %v136, %v363
  %365 = vdwg.mxu0
  %366 = vmatprep.subr.mxu0 %v289
  %367 = vmatpush1.msra.mxu0 %v287
  %368 = vmatprep.subr.mxu0 0.0
  %369 = vmatpush1.msra.mxu0 0.0
  %370 = vmatprep.subr.mxu0 0.0
  %371 = vmatpush1.msra.mxu0 0.0
  %372 = vmatprep.subr.mxu0 0.0
  %373 = vmatpush1.msra.mxu0 0.0
  %374 = vmatprep.subr.mxu0 0.0
  %375 = vmatpush1.msra.mxu0 0.0
  %376 = vmatprep.subr.mxu0 0.0
  %377 = vmatpush1.msra.mxu0 0.0
  %378 = vmatprep.subr.mxu0 0.0
  %379 = vmatpush1.msra.mxu0 0.0
  %380 = vmatprep.subr.mxu0 0.0
  %381 = vmatpush1.msra.mxu0 0.0
  %382 = vmatprep.subr.mxu0 0.0
  %383 = vmatpush1.msra.mxu0 0.0
  %384 = vmatprep.subr.mxu0 0.0
  %385 = vmatpush1.msra.mxu0 0.0
  %386 = vmatprep.subr.mxu0 0.0
  %387 = vmatpush1.msra.mxu0 0.0
  %388 = vmatprep.subr.mxu0 0.0
  %389 = vmatpush1.msra.mxu0 0.0
  %390 = vmatprep.subr.mxu0 0.0
  %391 = vmatpush1.msra.mxu0 0.0
  %392 = vmatprep.subr.mxu0 0.0
  %393 = vmatpush1.msra.mxu0 0.0
  %394 = vmatprep.subr.mxu0 0.0
  %395 = vmatpush1.msra.mxu0 0.0
  %396 = vmatprep.subr.mxu0 0.0
  %397 = vmatpush1.msra.mxu0 0.0
  %398 = vmatprep.subr.mxu0 0.0
  %399 = vmatpush1.msra.mxu0 0.0
  %400 = vmatprep.subr.mxu0 0.0
  %401 = vmatpush1.msra.mxu0 0.0
  %402 = vmatprep.subr.mxu0 0.0
  %403 = vmatpush1.msra.mxu0 0.0
  %404 = vmatprep.subr.mxu0 0.0
  %405 = vmatpush1.msra.mxu0 0.0
  %406 = vmatprep.subr.mxu0 0.0
  %407 = vmatpush1.msra.mxu0 0.0
  %408 = vmatprep.subr.mxu0 0.0
  %409 = vmatpush1.msra.mxu0 0.0
  %410 = vmatprep.subr.mxu0 0.0
  %411 = vmatpush1.msra.mxu0 0.0
  %412 = vmatprep.subr.mxu0 0.0
  %413 = vmatpush1.msra.mxu0 0.0
  %414 = vmatprep.subr.mxu0 0.0
  %415 = vmatpush1.msra.mxu0 0.0
  %416 = vmatprep.subr.mxu0 0.0
  %417 = vmatpush1.msra.mxu0 0.0
  %418 = vmatprep.subr.mxu0 0.0
  %419 = vmatpush1.msra.mxu0 0.0
  %420 = vmatprep.subr.mxu0 0.0
  %421 = vmatpush1.msra.mxu0 0.0
  %422 = vmatprep.subr.mxu0 0.0
  %423 = vmatpush1.msra.mxu0 0.0
  %424 = vmatprep.subr.mxu0 0.0
  %425 = vmatpush1.msra.mxu0 0.0
  %426 = vmatprep.subr.mxu0 0.0
  %427 = vmatpush1.msra.mxu0 0.0
  %428 = vmatprep.subr.mxu0 0.0
  %429 = vmatpush1.msra.mxu0 0.0
  %430 = vmatprep.mubr.f32.mxu0 0.0
  %431 = vmatmul.mubr.f32.gmra.mrb[0].mxu0 %v281
  %v432 = vpop.f32.mrb[0].mxu0
  %v433 = vadd.f32 %v205, %v432
  %v434 = vpop.f32.mrb[0].mxu0
  %v435 = vadd.f32 %v207, %v434
  %436 = vdwg.mxu0
  %437 = vmatprep.subr.mxu0 %v293
  %438 = vmatpush1.msra.mxu0 %v291
  %439 = vmatprep.subr.mxu0 0.0
  %440 = vmatpush1.msra.mxu0 0.0
  %441 = vmatprep.subr.mxu0 0.0
  %442 = vmatpush1.msra.mxu0 0.0
  %443 = vmatprep.subr.mxu0 0.0
  %444 = vmatpush1.msra.mxu0 0.0
  %445 = vmatprep.subr.mxu0 0.0
  %446 = vmatpush1.msra.mxu0 0.0
  %447 = vmatprep.subr.mxu0 0.0
  %448 = vmatpush1.msra.mxu0 0.0
  %449 = vmatprep.subr.mxu0 0.0
  %450 = vmatpush1.msra.mxu0 0.0
  %451 = vmatprep.subr.mxu0 0.0
  %452 = vmatpush1.msra.mxu0 0.0
  %453 = vmatprep.subr.mxu0 0.0
  %454 = vmatpush1.msra.mxu0 0.0
  %455 = vmatprep.subr.mxu0 0.0
  %456 = vmatpush1.msra.mxu0 0.0
  %457 = vmatprep.subr.mxu0 0.0
  %458 = vmatpush1.msra.mxu0 0.0
  %459 = vmatprep.subr.mxu0 0.0
  %460 = vmatpush1.msra.mxu0 0.0
  %461 = vmatprep.subr.mxu0 0.0
  %462 = vmatpush1.msra.mxu0 0.0
  %463 = vmatprep.subr.mxu0 0.0
  %464 = vmatpush1.msra.mxu0 0.0
  %465 = vmatprep.subr.mxu0 0.0
  %466 = vmatpush1.msra.mxu0 0.0
  %467 = vmatprep.subr.mxu0 0.0
  %468 = vmatpush1.msra.mxu0 0.0
  %469 = vmatprep.subr.mxu0 0.0
  %470 = vmatpush1.msra.mxu0 0.0
  %471 = vmatprep.subr.mxu0 0.0
  %472 = vmatpush1.msra.mxu0 0.0
  %473 = vmatprep.subr.mxu0 0.0
  %474 = vmatpush1.msra.mxu0 0.0
  %475 = vmatprep.subr.mxu0 0.0
  %476 = vmatpush1.msra.mxu0 0.0
  %477 = vmatprep.subr.mxu0 0.0
  %478 = vmatpush1.msra.mxu0 0.0
  %479 = vmatprep.subr.mxu0 0.0
  %480 = vmatpush1.msra.mxu0 0.0
  %481 = vmatprep.subr.mxu0 0.0
  %482 = vmatpush1.msra.mxu0 0.0
  %483 = vmatprep.subr.mxu0 0.0
  %484 = vmatpush1.msra.mxu0 0.0
  %485 = vmatprep.subr.mxu0 0.0
  %486 = vmatpush1.msra.mxu0 0.0
  %487 = vmatprep.subr.mxu0 0.0
  %488 = vmatpush1.msra.mxu0 0.0
  %489 = vmatprep.subr.mxu0 0.0
  %490 = vmatpush1.msra.mxu0 0.0
  %491 = vmatprep.subr.mxu0 0.0
  %492 = vmatpush1.msra.mxu0 0.0
  %493 = vmatprep.subr.mxu0 0.0
  %494 = vmatpush1.msra.mxu0 0.0
  %495 = vmatprep.subr.mxu0 0.0
  %496 = vmatpush1.msra.mxu0 0.0
  %497 = vmatprep.subr.mxu0 0.0
  %498 = vmatpush1.msra.mxu0 0.0
  %499 = vmatprep.subr.mxu0 0.0
  %500 = vmatpush1.msra.mxu0 0.0
  %501 = vmatprep.mubr.f32.mxu0 0.0
  %502 = vmatmul.mubr.f32.gmra.mrb[0].mxu0 %v281
  %v503 = vpop.f32.mrb[0].mxu0
  %v504 = vadd.f32 %v276, %v503
  %v505 = vpop.f32.mrb[0].mxu0
  %v506 = vadd.f32 %v278, %v505
  %507 = vdwg.mxu0
  %v508 = vld [vmem:[%s0] sm:$0xff]
  %v509 = vld [vmem:[%s0 + $0x8] sm:$0xff]
  %v510 = vld [vmem:[%s0 + $0x10] sm:$0xff]
  %s511 = scalar_lea.vmem %s1, 16
  %v512 = vld [vmem:[%s511] sm:$0xff]
  %v516 = vcombine.high %v508, %v508
  %v517 = vcombine.high %v509, %v509
  %v518 = vcombine.high %v510, %v510
  %519 = vrot.lane.b32.xlu0 %v508, 126
  %v520 = vpop.permute.xlu0 %519
  %521 = vrot.lane.b32.xlu0 %v516, 126
  %v522 = vpop.permute.xlu0 %521
  %523 = vrot.lane.b32.xlu0 %v509, 126
  %v524 = vpop.permute.xlu0 %523
  %525 = vrot.lane.b32.xlu0 %v517, 126
  %v526 = vpop.permute.xlu0 %525
  %527 = vrot.lane.b32.xlu0 %v510, 126
  %v528 = vpop.permute.xlu0 %527
  %529 = vrot.lane.b32.xlu0 %v518, 126
  %v530 = vpop.permute.xlu0 %529
  %vm531 = vcmask 1031168
  %v532 = vsel %vm531, %v520, %v522
  %v533 = vsel %vm531, %v522, %v524
  %v534 = vsel %vm531, %v524, %v526
  %v535 = vsel %vm531, %v526, %v528
  %v536 = vsel %vm531, %v528, %v530
  %v538 = vsel %vm50, %v512, 0
  %v540 = vsel %vm54, %v532, 0
  %v542 = vsel %vm54, %v533, 0
  %v544 = vsel %vm54, %v534, 0
  %v546 = vsel %vm54, %v535, 0
  %v548 = vsel %vm54, %v536, 0
  %v550 = vsel %vm54, %v530, 0
  %552 = vmatprep.subr.mxu0 %v542
  %553 = vmatpush1.msra.mxu0 %v540
  %554 = vmatprep.subr.mxu0 0.0
  %555 = vmatpush1.msra.mxu0 0.0
  %556 = vmatprep.subr.mxu0 0.0
  %557 = vmatpush1.msra.mxu0 0.0
  %558 = vmatprep.subr.mxu0 0.0
  %559 = vmatpush1.msra.mxu0 0.0
  %560 = vmatprep.subr.mxu0 0.0
  %561 = vmatpush1.msra.mxu0 0.0
  %562 = vmatprep.subr.mxu0 0.0
  %563 = vmatpush1.msra.mxu0 0.0
  %564 = vmatprep.subr.mxu0 0.0
  %565 = vmatpush1.msra.mxu0 0.0
  %566 = vmatprep.subr.mxu0 0.0
  %567 = vmatpush1.msra.mxu0 0.0
  %568 = vmatprep.subr.mxu0 0.0
  %569 = vmatpush1.msra.mxu0 0.0
  %570 = vmatprep.subr.mxu0 0.0
  %571 = vmatpush1.msra.mxu0 0.0
  %572 = vmatprep.subr.mxu0 0.0
  %573 = vmatpush1.msra.mxu0 0.0
  %574 = vmatprep.subr.mxu0 0.0
  %575 = vmatpush1.msra.mxu0 0.0
  %576 = vmatprep.subr.mxu0 0.0
  %577 = vmatpush1.msra.mxu0 0.0
  %578 = vmatprep.subr.mxu0 0.0
  %579 = vmatpush1.msra.mxu0 0.0
  %580 = vmatprep.subr.mxu0 0.0
  %581 = vmatpush1.msra.mxu0 0.0
  %582 = vmatprep.subr.mxu0 0.0
  %583 = vmatpush1.msra.mxu0 0.0
  %584 = vmatprep.subr.mxu0 0.0
  %585 = vmatpush1.msra.mxu0 0.0
  %586 = vmatprep.subr.mxu0 0.0
  %587 = vmatpush1.msra.mxu0 0.0
  %588 = vmatprep.subr.mxu0 0.0
  %589 = vmatpush1.msra.mxu0 0.0
  %590 = vmatprep.subr.mxu0 0.0
  %591 = vmatpush1.msra.mxu0 0.0
  %592 = vmatprep.subr.mxu0 0.0
  %593 = vmatpush1.msra.mxu0 0.0
  %594 = vmatprep.subr.mxu0 0.0
  %595 = vmatpush1.msra.mxu0 0.0
  %596 = vmatprep.subr.mxu0 0.0
  %597 = vmatpush1.msra.mxu0 0.0
  %598 = vmatprep.subr.mxu0 0.0
  %599 = vmatpush1.msra.mxu0 0.0
  %600 = vmatprep.subr.mxu0 0.0
  %601 = vmatpush1.msra.mxu0 0.0
  %602 = vmatprep.subr.mxu0 0.0
  %603 = vmatpush1.msra.mxu0 0.0
  %604 = vmatprep.subr.mxu0 0.0
  %605 = vmatpush1.msra.mxu0 0.0
  %606 = vmatprep.subr.mxu0 0.0
  %607 = vmatpush1.msra.mxu0 0.0
  %608 = vmatprep.subr.mxu0 0.0
  %609 = vmatpush1.msra.mxu0 0.0
  %610 = vmatprep.subr.mxu0 0.0
  %611 = vmatpush1.msra.mxu0 0.0
  %612 = vmatprep.subr.mxu0 0.0
  %613 = vmatpush1.msra.mxu0 0.0
  %614 = vmatprep.subr.mxu0 0.0
  %615 = vmatpush1.msra.mxu0 0.0
  %616 = vmatprep.mubr.f32.mxu0 0.0
  %617 = vmatmul.mubr.f32.gmra.mrb[0].mxu0 %v538
  %v618 = vpop.f32.mrb[0].mxu0
  %v619 = vadd.f32 0.0, %v618
  %v620 = vpop.f32.mrb[0].mxu0
  %v621 = vadd.f32 0.0, %v620
  %622 = vdwg.mxu0
  %623 = vmatprep.subr.mxu0 %v546
  %624 = vmatpush1.msra.mxu0 %v544
  %625 = vmatprep.subr.mxu0 0.0
  %626 = vmatpush1.msra.mxu0 0.0
  %627 = vmatprep.subr.mxu0 0.0
  %628 = vmatpush1.msra.mxu0 0.0
  %629 = vmatprep.subr.mxu0 0.0
  %630 = vmatpush1.msra.mxu0 0.0
  %631 = vmatprep.subr.mxu0 0.0
  %632 = vmatpush1.msra.mxu0 0.0
  %633 = vmatprep.subr.mxu0 0.0
  %634 = vmatpush1.msra.mxu0 0.0
  %635 = vmatprep.subr.mxu0 0.0
  %636 = vmatpush1.msra.mxu0 0.0
  %637 = vmatprep.subr.mxu0 0.0
  %638 = vmatpush1.msra.mxu0 0.0
  %639 = vmatprep.subr.mxu0 0.0
  %640 = vmatpush1.msra.mxu0 0.0
  %641 = vmatprep.subr.mxu0 0.0
  %642 = vmatpush1.msra.mxu0 0.0
  %643 = vmatprep.subr.mxu0 0.0
  %644 = vmatpush1.msra.mxu0 0.0
  %645 = vmatprep.subr.mxu0 0.0
  %646 = vmatpush1.msra.mxu0 0.0
  %647 = vmatprep.subr.mxu0 0.0
  %648 = vmatpush1.msra.mxu0 0.0
  %649 = vmatprep.subr.mxu0 0.0
  %650 = vmatpush1.msra.mxu0 0.0
  %651 = vmatprep.subr.mxu0 0.0
  %652 = vmatpush1.msra.mxu0 0.0
  %653 = vmatprep.subr.mxu0 0.0
  %654 = vmatpush1.msra.mxu0 0.0
  %655 = vmatprep.subr.mxu0 0.0
  %656 = vmatpush1.msra.mxu0 0.0
  %657 = vmatprep.subr.mxu0 0.0
  %658 = vmatpush1.msra.mxu0 0.0
  %659 = vmatprep.subr.mxu0 0.0
  %660 = vmatpush1.msra.mxu0 0.0
  %661 = vmatprep.subr.mxu0 0.0
  %662 = vmatpush1.msra.mxu0 0.0
  %663 = vmatprep.subr.mxu0 0.0
  %664 = vmatpush1.msra.mxu0 0.0
  %665 = vmatprep.subr.mxu0 0.0
  %666 = vmatpush1.msra.mxu0 0.0
  %667 = vmatprep.subr.mxu0 0.0
  %668 = vmatpush1.msra.mxu0 0.0
  %669 = vmatprep.subr.mxu0 0.0
  %670 = vmatpush1.msra.mxu0 0.0
  %671 = vmatprep.subr.mxu0 0.0
  %672 = vmatpush1.msra.mxu0 0.0
  %673 = vmatprep.subr.mxu0 0.0
  %674 = vmatpush1.msra.mxu0 0.0
  %675 = vmatprep.subr.mxu0 0.0
  %676 = vmatpush1.msra.mxu0 0.0
  %677 = vmatprep.subr.mxu0 0.0
  %678 = vmatpush1.msra.mxu0 0.0
  %679 = vmatprep.subr.mxu0 0.0
  %680 = vmatpush1.msra.mxu0 0.0
  %681 = vmatprep.subr.mxu0 0.0
  %682 = vmatpush1.msra.mxu0 0.0
  %683 = vmatprep.subr.mxu0 0.0
  %684 = vmatpush1.msra.mxu0 0.0
  %685 = vmatprep.subr.mxu0 0.0
  %686 = vmatpush1.msra.mxu0 0.0
  %687 = vmatprep.mubr.f32.mxu0 0.0
  %688 = vmatmul.mubr.f32.gmra.mrb[0].mxu0 %v538
  %v689 = vpop.f32.mrb[0].mxu0
  %v690 = vadd.f32 0.0, %v689
  %v691 = vpop.f32.mrb[0].mxu0
  %v692 = vadd.f32 0.0, %v691
  %693 = vdwg.mxu0
  %694 = vmatprep.subr.mxu0 %v550
  %695 = vmatpush1.msra.mxu0 %v548
  %696 = vmatprep.subr.mxu0 0.0
  %697 = vmatpush1.msra.mxu0 0.0
  %698 = vmatprep.subr.mxu0 0.0
  %699 = vmatpush1.msra.mxu0 0.0
  %700 = vmatprep.subr.mxu0 0.0
  %701 = vmatpush1.msra.mxu0 0.0
  %702 = vmatprep.subr.mxu0 0.0
  %703 = vmatpush1.msra.mxu0 0.0
  %704 = vmatprep.subr.mxu0 0.0
  %705 = vmatpush1.msra.mxu0 0.0
  %706 = vmatprep.subr.mxu0 0.0
  %707 = vmatpush1.msra.mxu0 0.0
  %708 = vmatprep.subr.mxu0 0.0
  %709 = vmatpush1.msra.mxu0 0.0
  %710 = vmatprep.subr.mxu0 0.0
  %711 = vmatpush1.msra.mxu0 0.0
  %712 = vmatprep.subr.mxu0 0.0
  %713 = vmatpush1.msra.mxu0 0.0
  %714 = vmatprep.subr.mxu0 0.0
  %715 = vmatpush1.msra.mxu0 0.0
  %716 = vmatprep.subr.mxu0 0.0
  %717 = vmatpush1.msra.mxu0 0.0
  %718 = vmatprep.subr.mxu0 0.0
  %719 = vmatpush1.msra.mxu0 0.0
  %720 = vmatprep.subr.mxu0 0.0
  %721 = vmatpush1.msra.mxu0 0.0
  %722 = vmatprep.subr.mxu0 0.0
  %723 = vmatpush1.msra.mxu0 0.0
  %724 = vmatprep.subr.mxu0 0.0
  %725 = vmatpush1.msra.mxu0 0.0
  %726 = vmatprep.subr.mxu0 0.0
  %727 = vmatpush1.msra.mxu0 0.0
  %728 = vmatprep.subr.mxu0 0.0
  %729 = vmatpush1.msra.mxu0 0.0
  %730 = vmatprep.subr.mxu0 0.0
  %731 = vmatpush1.msra.mxu0 0.0
  %732 = vmatprep.subr.mxu0 0.0
  %733 = vmatpush1.msra.mxu0 0.0
  %734 = vmatprep.subr.mxu0 0.0
  %735 = vmatpush1.msra.mxu0 0.0
  %736 = vmatprep.subr.mxu0 0.0
  %737 = vmatpush1.msra.mxu0 0.0
  %738 = vmatprep.subr.mxu0 0.0
  %739 = vmatpush1.msra.mxu0 0.0
  %740 = vmatprep.subr.mxu0 0.0
  %741 = vmatpush1.msra.mxu0 0.0
  %742 = vmatprep.subr.mxu0 0.0
  %743 = vmatpush1.msra.mxu0 0.0
  %744 = vmatprep.subr.mxu0 0.0
  %745 = vmatpush1.msra.mxu0 0.0
  %746 = vmatprep.subr.mxu0 0.0
  %747 = vmatpush1.msra.mxu0 0.0
  %748 = vmatprep.subr.mxu0 0.0
  %749 = vmatpush1.msra.mxu0 0.0
  %750 = vmatprep.subr.mxu0 0.0
  %751 = vmatpush1.msra.mxu0 0.0
  %752 = vmatprep.subr.mxu0 0.0
  %753 = vmatpush1.msra.mxu0 0.0
  %754 = vmatprep.subr.mxu0 0.0
  %755 = vmatpush1.msra.mxu0 0.0
  %756 = vmatprep.subr.mxu0 0.0
  %757 = vmatpush1.msra.mxu0 0.0
  %758 = vmatprep.mubr.f32.mxu0 0.0
  %759 = vmatmul.mubr.f32.gmra.mrb[0].mxu0 %v538
  %v760 = vpop.f32.mrb[0].mxu0
  %v761 = vadd.f32 0.0, %v760
  %v762 = vpop.f32.mrb[0].mxu0
  %v763 = vadd.f32 0.0, %v762
  %764 = vdwg.mxu0
  %v765 = vadd.f32 %v362, %v619
  %v766 = vadd.f32 %v364, %v621
  %v767 = vadd.f32 %v433, %v690
  %v768 = vadd.f32 %v435, %v692
  %v769 = vadd.f32 %v504, %v761
  %v770 = vadd.f32 %v506, %v763
  %v771 = vld [vmem:[%s0] sm:$0xff]
  %v772 = vld [vmem:[%s0 + $0x8] sm:$0xff]
  %v773 = vld [vmem:[%s0 + $0x10] sm:$0xff]
  %s774 = scalar_lea.vmem %s1, 24
  %v775 = vld [vmem:[%s774] sm:$0xff]
  %v779 = vcombine.high %v771, %v771
  %v780 = vcombine.high %v772, %v772
  %v781 = vcombine.high %v773, %v773
  %782 = vrot.lane.b32.xlu0 %v771, 110
  %v783 = vpop.permute.xlu0 %782
  %784 = vrot.lane.b32.xlu0 %v779, 110
  %v785 = vpop.permute.xlu0 %784
  %786 = vrot.lane.b32.xlu0 %v772, 110
  %v787 = vpop.permute.xlu0 %786
  %788 = vrot.lane.b32.xlu0 %v780, 110
  %v789 = vpop.permute.xlu0 %788
  %790 = vrot.lane.b32.xlu0 %v773, 110
  %v791 = vpop.permute.xlu0 %790
  %792 = vrot.lane.b32.xlu0 %v781, 110
  %v793 = vpop.permute.xlu0 %792
  %vm794 = vcmask 900096
  %v795 = vsel %vm794, %v783, %v785
  %v796 = vsel %vm794, %v785, %v787
  %v797 = vsel %vm794, %v787, %v789
  %v798 = vsel %vm794, %v789, %v791
  %v799 = vsel %vm794, %v791, %v793
  %v801 = vsel %vm50, %v775, 0
  %v803 = vsel %vm54, %v795, 0
  %v805 = vsel %vm54, %v796, 0
  %v807 = vsel %vm54, %v797, 0
  %v809 = vsel %vm54, %v798, 0
  %v811 = vsel %vm54, %v799, 0
  %v813 = vsel %vm54, %v793, 0
  %815 = vmatprep.subr.mxu0 %v805
  %816 = vmatpush1.msra.mxu0 %v803
  %817 = vmatprep.subr.mxu0 0.0
  %818 = vmatpush1.msra.mxu0 0.0
  %819 = vmatprep.subr.mxu0 0.0
  %820 = vmatpush1.msra.mxu0 0.0
  %821 = vmatprep.subr.mxu0 0.0
  %822 = vmatpush1.msra.mxu0 0.0
  %823 = vmatprep.subr.mxu0 0.0
  %824 = vmatpush1.msra.mxu0 0.0
  %825 = vmatprep.subr.mxu0 0.0
  %826 = vmatpush1.msra.mxu0 0.0
  %827 = vmatprep.subr.mxu0 0.0
  %828 = vmatpush1.msra.mxu0 0.0
  %829 = vmatprep.subr.mxu0 0.0
  %830 = vmatpush1.msra.mxu0 0.0
  %831 = vmatprep.subr.mxu0 0.0
  %832 = vmatpush1.msra.mxu0 0.0
  %833 = vmatprep.subr.mxu0 0.0
  %834 = vmatpush1.msra.mxu0 0.0
  %835 = vmatprep.subr.mxu0 0.0
  %836 = vmatpush1.msra.mxu0 0.0
  %837 = vmatprep.subr.mxu0 0.0
  %838 = vmatpush1.msra.mxu0 0.0
  %839 = vmatprep.subr.mxu0 0.0
  %840 = vmatpush1.msra.mxu0 0.0
  %841 = vmatprep.subr.mxu0 0.0
  %842 = vmatpush1.msra.mxu0 0.0
  %843 = vmatprep.subr.mxu0 0.0
  %844 = vmatpush1.msra.mxu0 0.0
  %845 = vmatprep.subr.mxu0 0.0
  %846 = vmatpush1.msra.mxu0 0.0
  %847 = vmatprep.subr.mxu0 0.0
  %848 = vmatpush1.msra.mxu0 0.0
  %849 = vmatprep.subr.mxu0 0.0
  %850 = vmatpush1.msra.mxu0 0.0
  %851 = vmatprep.subr.mxu0 0.0
  %852 = vmatpush1.msra.mxu0 0.0
  %853 = vmatprep.subr.mxu0 0.0
  %854 = vmatpush1.msra.mxu0 0.0
  %855 = vmatprep.subr.mxu0 0.0
  %856 = vmatpush1.msra.mxu0 0.0
  %857 = vmatprep.subr.mxu0 0.0
  %858 = vmatpush1.msra.mxu0 0.0
  %859 = vmatprep.subr.mxu0 0.0
  %860 = vmatpush1.msra.mxu0 0.0
  %861 = vmatprep.subr.mxu0 0.0
  %862 = vmatpush1.msra.mxu0 0.0
  %863 = vmatprep.subr.mxu0 0.0
  %864 = vmatpush1.msra.mxu0 0.0
  %865 = vmatprep.subr.mxu0 0.0
  %866 = vmatpush1.msra.mxu0 0.0
  %867 = vmatprep.subr.mxu0 0.0
  %868 = vmatpush1.msra.mxu0 0.0
  %869 = vmatprep.subr.mxu0 0.0
  %870 = vmatpush1.msra.mxu0 0.0
  %871 = vmatprep.subr.mxu0 0.0
  %872 = vmatpush1.msra.mxu0 0.0
  %873 = vmatprep.subr.mxu0 0.0
  %874 = vmatpush1.msra.mxu0 0.0
  %875 = vmatprep.subr.mxu0 0.0
  %876 = vmatpush1.msra.mxu0 0.0
  %877 = vmatprep.subr.mxu0 0.0
  %878 = vmatpush1.msra.mxu0 0.0
  %879 = vmatprep.mubr.f32.mxu0 0.0
  %880 = vmatmul.mubr.f32.gmra.mrb[0].mxu0 %v801
  %v881 = vpop.f32.mrb[0].mxu0
  %v882 = vadd.f32 0.0, %v881
  %v883 = vpop.f32.mrb[0].mxu0
  %v884 = vadd.f32 0.0, %v883
  %885 = vdwg.mxu0
  %886 = vmatprep.subr.mxu0 %v809
  %887 = vmatpush1.msra.mxu0 %v807
  %888 = vmatprep.subr.mxu0 0.0
  %889 = vmatpush1.msra.mxu0 0.0
  %890 = vmatprep.subr.mxu0 0.0
  %891 = vmatpush1.msra.mxu0 0.0
  %892 = vmatprep.subr.mxu0 0.0
  %893 = vmatpush1.msra.mxu0 0.0
  %894 = vmatprep.subr.mxu0 0.0
  %895 = vmatpush1.msra.mxu0 0.0
  %896 = vmatprep.subr.mxu0 0.0
  %897 = vmatpush1.msra.mxu0 0.0
  %898 = vmatprep.subr.mxu0 0.0
  %899 = vmatpush1.msra.mxu0 0.0
  %900 = vmatprep.subr.mxu0 0.0
  %901 = vmatpush1.msra.mxu0 0.0
  %902 = vmatprep.subr.mxu0 0.0
  %903 = vmatpush1.msra.mxu0 0.0
  %904 = vmatprep.subr.mxu0 0.0
  %905 = vmatpush1.msra.mxu0 0.0
  %906 = vmatprep.subr.mxu0 0.0
  %907 = vmatpush1.msra.mxu0 0.0
  %908 = vmatprep.subr.mxu0 0.0
  %909 = vmatpush1.msra.mxu0 0.0
  %910 = vmatprep.subr.mxu0 0.0
  %911 = vmatpush1.msra.mxu0 0.0
  %912 = vmatprep.subr.mxu0 0.0
  %913 = vmatpush1.msra.mxu0 0.0
  %914 = vmatprep.subr.mxu0 0.0
  %915 = vmatpush1.msra.mxu0 0.0
  %916 = vmatprep.subr.mxu0 0.0
  %917 = vmatpush1.msra.mxu0 0.0
  %918 = vmatprep.subr.mxu0 0.0
  %919 = vmatpush1.msra.mxu0 0.0
  %920 = vmatprep.subr.mxu0 0.0
  %921 = vmatpush1.msra.mxu0 0.0
  %922 = vmatprep.subr.mxu0 0.0
  %923 = vmatpush1.msra.mxu0 0.0
  %924 = vmatprep.subr.mxu0 0.0
  %925 = vmatpush1.msra.mxu0 0.0
  %926 = vmatprep.subr.mxu0 0.0
  %927 = vmatpush1.msra.mxu0 0.0
  %928 = vmatprep.subr.mxu0 0.0
  %929 = vmatpush1.msra.mxu0 0.0
  %930 = vmatprep.subr.mxu0 0.0
  %931 = vmatpush1.msra.mxu0 0.0
  %932 = vmatprep.subr.mxu0 0.0
  %933 = vmatpush1.msra.mxu0 0.0
  %934 = vmatprep.subr.mxu0 0.0
  %935 = vmatpush1.msra.mxu0 0.0
  %936 = vmatprep.subr.mxu0 0.0
  %937 = vmatpush1.msra.mxu0 0.0
  %938 = vmatprep.subr.mxu0 0.0
  %939 = vmatpush1.msra.mxu0 0.0
  %940 = vmatprep.subr.mxu0 0.0
  %941 = vmatpush1.msra.mxu0 0.0
  %942 = vmatprep.subr.mxu0 0.0
  %943 = vmatpush1.msra.mxu0 0.0
  %944 = vmatprep.subr.mxu0 0.0
  %945 = vmatpush1.msra.mxu0 0.0
  %946 = vmatprep.subr.mxu0 0.0
  %947 = vmatpush1.msra.mxu0 0.0
  %948 = vmatprep.subr.mxu0 0.0
  %949 = vmatpush1.msra.mxu0 0.0
  %950 = vmatprep.mubr.f32.mxu0 0.0
  %951 = vmatmul.mubr.f32.gmra.mrb[0].mxu0 %v801
  %v952 = vpop.f32.mrb[0].mxu0
  %v953 = vadd.f32 0.0, %v952
  %v954 = vpop.f32.mrb[0].mxu0
  %v955 = vadd.f32 0.0, %v954
  %956 = vdwg.mxu0
  %957 = vmatprep.subr.mxu0 %v813
  %958 = vmatpush1.msra.mxu0 %v811
  %959 = vmatprep.subr.mxu0 0.0
  %960 = vmatpush1.msra.mxu0 0.0
  %961 = vmatprep.subr.mxu0 0.0
  %962 = vmatpush1.msra.mxu0 0.0
  %963 = vmatprep.subr.mxu0 0.0
  %964 = vmatpush1.msra.mxu0 0.0
  %965 = vmatprep.subr.mxu0 0.0
  %966 = vmatpush1.msra.mxu0 0.0
  %967 = vmatprep.subr.mxu0 0.0
  %968 = vmatpush1.msra.mxu0 0.0
  %969 = vmatprep.subr.mxu0 0.0
  %970 = vmatpush1.msra.mxu0 0.0
  %971 = vmatprep.subr.mxu0 0.0
  %972 = vmatpush1.msra.mxu0 0.0
  %973 = vmatprep.subr.mxu0 0.0
  %974 = vmatpush1.msra.mxu0 0.0
  %975 = vmatprep.subr.mxu0 0.0
  %976 = vmatpush1.msra.mxu0 0.0
  %977 = vmatprep.subr.mxu0 0.0
  %978 = vmatpush1.msra.mxu0 0.0
  %979 = vmatprep.subr.mxu0 0.0
  %980 = vmatpush1.msra.mxu0 0.0
  %981 = vmatprep.subr.mxu0 0.0
  %982 = vmatpush1.msra.mxu0 0.0
  %983 = vmatprep.subr.mxu0 0.0
  %984 = vmatpush1.msra.mxu0 0.0
  %985 = vmatprep.subr.mxu0 0.0
  %986 = vmatpush1.msra.mxu0 0.0
  %987 = vmatprep.subr.mxu0 0.0
  %988 = vmatpush1.msra.mxu0 0.0
  %989 = vmatprep.subr.mxu0 0.0
  %990 = vmatpush1.msra.mxu0 0.0
  %991 = vmatprep.subr.mxu0 0.0
  %992 = vmatpush1.msra.mxu0 0.0
  %993 = vmatprep.subr.mxu0 0.0
  %994 = vmatpush1.msra.mxu0 0.0
  %995 = vmatprep.subr.mxu0 0.0
  %996 = vmatpush1.msra.mxu0 0.0
  %997 = vmatprep.subr.mxu0 0.0
  %998 = vmatpush1.msra.mxu0 0.0
  %999 = vmatprep.subr.mxu0 0.0
  %1000 = vmatpush1.msra.mxu0 0.0
  %1001 = vmatprep.subr.mxu0 0.0
  %1002 = vmatpush1.msra.mxu0 0.0
  %1003 = vmatprep.subr.mxu0 0.0
  %1004 = vmatpush1.msra.mxu0 0.0
  %1005 = vmatprep.subr.mxu0 0.0
  %1006 = vmatpush1.msra.mxu0 0.0
  %1007 = vmatprep.subr.mxu0 0.0
  %1008 = vmatpush1.msra.mxu0 0.0
  %1009 = vmatprep.subr.mxu0 0.0
  %1010 = vmatpush1.msra.mxu0 0.0
  %1011 = vmatprep.subr.mxu0 0.0
  %1012 = vmatpush1.msra.mxu0 0.0
  %1013 = vmatprep.subr.mxu0 0.0
  %1014 = vmatpush1.msra.mxu0 0.0
  %1015 = vmatprep.subr.mxu0 0.0
  %1016 = vmatpush1.msra.mxu0 0.0
  %1017 = vmatprep.subr.mxu0 0.0
  %1018 = vmatpush1.msra.mxu0 0.0
  %1019 = vmatprep.subr.mxu0 0.0
  %1020 = vmatpush1.msra.mxu0 0.0
  %1021 = vmatprep.mubr.f32.mxu0 0.0
  %1022 = vmatmul.mubr.f32.gmra.mrb[0].mxu0 %v801
  %v1023 = vpop.f32.mrb[0].mxu0
  %v1024 = vadd.f32 0.0, %v1023
  %v1025 = vpop.f32.mrb[0].mxu0
  %v1026 = vadd.f32 0.0, %v1025
  %1027 = vdwg.mxu0
  %v1028 = vadd.f32 %v765, %v882
  %v1029 = vadd.f32 %v766, %v884
  %v1030 = vadd.f32 %v767, %v953
  %v1031 = vadd.f32 %v768, %v955
  %v1032 = vadd.f32 %v769, %v1024
  %v1033 = vadd.f32 %v770, %v1026
  %v1034 = vld [vmem:[%s0] sm:$0xff]
  %v1035 = vld [vmem:[%s0 + $0x8] sm:$0xff]
  %v1036 = vld [vmem:[%s0 + $0x10] sm:$0xff]
  %s1037 = scalar_lea.vmem %s1, 32
  %v1038 = vld [vmem:[%s1037] sm:$0xff]
  %v1042 = vcombine.high %v1034, %v1034
  %v1043 = vcombine.high %v1035, %v1035
  %v1044 = vcombine.high %v1036, %v1036
  %1045 = vrot.lane.b32.xlu0 %v1034, 109
  %v1046 = vpop.permute.xlu0 %1045
  %1047 = vrot.lane.b32.xlu0 %v1042, 109
  %v1048 = vpop.permute.xlu0 %1047
  %1049 = vrot.lane.b32.xlu0 %v1035, 109
  %v1050 = vpop.permute.xlu0 %1049
  %1051 = vrot.lane.b32.xlu0 %v1043, 109
  %v1052 = vpop.permute.xlu0 %1051
  %1053 = vrot.lane.b32.xlu0 %v1036, 109
  %v1054 = vpop.permute.xlu0 %1053
  %1055 = vrot.lane.b32.xlu0 %v1044, 109
  %v1056 = vpop.permute.xlu0 %1055
  %vm1057 = vcmask 891904
  %v1058 = vsel %vm1057, %v1046, %v1048
  %v1059 = vsel %vm1057, %v1048, %v1050
  %v1060 = vsel %vm1057, %v1050, %v1052
  %v1061 = vsel %vm1057, %v1052, %v1054
  %v1062 = vsel %vm1057, %v1054, %v1056
  %v1064 = vsel %vm50, %v1038, 0
  %v1066 = vsel %vm54, %v1058, 0
  %v1068 = vsel %vm54, %v1059, 0
  %v1070 = vsel %vm54, %v1060, 0
  %v1072 = vsel %vm54, %v1061, 0
  %v1074 = vsel %vm54, %v1062, 0
  %v1076 = vsel %vm54, %v1056, 0
  %1078 = vmatprep.subr.mxu0 %v1068
  %1079 = vmatpush1.msra.mxu0 %v1066
  %1080 = vmatprep.subr.mxu0 0.0
  %1081 = vmatpush1.msra.mxu0 0.0
  %1082 = vmatprep.subr.mxu0 0.0
  %1083 = vmatpush1.msra.mxu0 0.0
  %1084 = vmatprep.subr.mxu0 0.0
  %1085 = vmatpush1.msra.mxu0 0.0
  %1086 = vmatprep.subr.mxu0 0.0
  %1087 = vmatpush1.msra.mxu0 0.0
  %1088 = vmatprep.subr.mxu0 0.0
  %1089 = vmatpush1.msra.mxu0 0.0
  %1090 = vmatprep.subr.mxu0 0.0
  %1091 = vmatpush1.msra.mxu0 0.0
  %1092 = vmatprep.subr.mxu0 0.0
  %1093 = vmatpush1.msra.mxu0 0.0
  %1094 = vmatprep.subr.mxu0 0.0
  %1095 = vmatpush1.msra.mxu0 0.0
  %1096 = vmatprep.subr.mxu0 0.0
  %1097 = vmatpush1.msra.mxu0 0.0
  %1098 = vmatprep.subr.mxu0 0.0
  %1099 = vmatpush1.msra.mxu0 0.0
  %1100 = vmatprep.subr.mxu0 0.0
  %1101 = vmatpush1.msra.mxu0 0.0
  %1102 = vmatprep.subr.mxu0 0.0
  %1103 = vmatpush1.msra.mxu0 0.0
  %1104 = vmatprep.subr.mxu0 0.0
  %1105 = vmatpush1.msra.mxu0 0.0
  %1106 = vmatprep.subr.mxu0 0.0
  %1107 = vmatpush1.msra.mxu0 0.0
  %1108 = vmatprep.subr.mxu0 0.0
  %1109 = vmatpush1.msra.mxu0 0.0
  %1110 = vmatprep.subr.mxu0 0.0
  %1111 = vmatpush1.msra.mxu0 0.0
  %1112 = vmatprep.subr.mxu0 0.0
  %1113 = vmatpush1.msra.mxu0 0.0
  %1114 = vmatprep.subr.mxu0 0.0
  %1115 = vmatpush1.msra.mxu0 0.0
  %1116 = vmatprep.subr.mxu0 0.0
  %1117 = vmatpush1.msra.mxu0 0.0
  %1118 = vmatprep.subr.mxu0 0.0
  %1119 = vmatpush1.msra.mxu0 0.0
  %1120 = vmatprep.subr.mxu0 0.0
  %1121 = vmatpush1.msra.mxu0 0.0
  %1122 = vmatprep.subr.mxu0 0.0
  %1123 = vmatpush1.msra.mxu0 0.0
  %1124 = vmatprep.subr.mxu0 0.0
  %1125 = vmatpush1.msra.mxu0 0.0
  %1126 = vmatprep.subr.mxu0 0.0
  %1127 = vmatpush1.msra.mxu0 0.0
  %1128 = vmatprep.subr.mxu0 0.0
  %1129 = vmatpush1.msra.mxu0 0.0
  %1130 = vmatprep.subr.mxu0 0.0
  %1131 = vmatpush1.msra.mxu0 0.0
  %1132 = vmatprep.subr.mxu0 0.0
  %1133 = vmatpush1.msra.mxu0 0.0
  %1134 = vmatprep.subr.mxu0 0.0
  %1135 = vmatpush1.msra.mxu0 0.0
  %1136 = vmatprep.subr.mxu0 0.0
  %1137 = vmatpush1.msra.mxu0 0.0
  %1138 = vmatprep.subr.mxu0 0.0
  %1139 = vmatpush1.msra.mxu0 0.0
  %1140 = vmatprep.subr.mxu0 0.0
  %1141 = vmatpush1.msra.mxu0 0.0
  %1142 = vmatprep.mubr.f32.mxu0 0.0
  %1143 = vmatmul.mubr.f32.gmra.mrb[0].mxu0 %v1064
  %v1144 = vpop.f32.mrb[0].mxu0
  %v1145 = vadd.f32 0.0, %v1144
  %v1146 = vpop.f32.mrb[0].mxu0
  %v1147 = vadd.f32 0.0, %v1146
  %1148 = vdwg.mxu0
  %1149 = vmatprep.subr.mxu0 %v1072
  %1150 = vmatpush1.msra.mxu0 %v1070
  %1151 = vmatprep.subr.mxu0 0.0
  %1152 = vmatpush1.msra.mxu0 0.0
  %1153 = vmatprep.subr.mxu0 0.0
  %1154 = vmatpush1.msra.mxu0 0.0
  %1155 = vmatprep.subr.mxu0 0.0
  %1156 = vmatpush1.msra.mxu0 0.0
  %1157 = vmatprep.subr.mxu0 0.0
  %1158 = vmatpush1.msra.mxu0 0.0
  %1159 = vmatprep.subr.mxu0 0.0
  %1160 = vmatpush1.msra.mxu0 0.0
  %1161 = vmatprep.subr.mxu0 0.0
  %1162 = vmatpush1.msra.mxu0 0.0
  %1163 = vmatprep.subr.mxu0 0.0
  %1164 = vmatpush1.msra.mxu0 0.0
  %1165 = vmatprep.subr.mxu0 0.0
  %1166 = vmatpush1.msra.mxu0 0.0
  %1167 = vmatprep.subr.mxu0 0.0
  %1168 = vmatpush1.msra.mxu0 0.0
  %1169 = vmatprep.subr.mxu0 0.0
  %1170 = vmatpush1.msra.mxu0 0.0
  %1171 = vmatprep.subr.mxu0 0.0
  %1172 = vmatpush1.msra.mxu0 0.0
  %1173 = vmatprep.subr.mxu0 0.0
  %1174 = vmatpush1.msra.mxu0 0.0
  %1175 = vmatprep.subr.mxu0 0.0
  %1176 = vmatpush1.msra.mxu0 0.0
  %1177 = vmatprep.subr.mxu0 0.0
  %1178 = vmatpush1.msra.mxu0 0.0
  %1179 = vmatprep.subr.mxu0 0.0
  %1180 = vmatpush1.msra.mxu0 0.0
  %1181 = vmatprep.subr.mxu0 0.0
  %1182 = vmatpush1.msra.mxu0 0.0
  %1183 = vmatprep.subr.mxu0 0.0
  %1184 = vmatpush1.msra.mxu0 0.0
  %1185 = vmatprep.subr.mxu0 0.0
  %1186 = vmatpush1.msra.mxu0 0.0
  %1187 = vmatprep.subr.mxu0 0.0
  %1188 = vmatpush1.msra.mxu0 0.0
  %1189 = vmatprep.subr.mxu0 0.0
  %1190 = vmatpush1.msra.mxu0 0.0
  %1191 = vmatprep.subr.mxu0 0.0
  %1192 = vmatpush1.msra.mxu0 0.0
  %1193 = vmatprep.subr.mxu0 0.0
  %1194 = vmatpush1.msra.mxu0 0.0
  %1195 = vmatprep.subr.mxu0 0.0
  %1196 = vmatpush1.msra.mxu0 0.0
  %1197 = vmatprep.subr.mxu0 0.0
  %1198 = vmatpush1.msra.mxu0 0.0
  %1199 = vmatprep.subr.mxu0 0.0
  %1200 = vmatpush1.msra.mxu0 0.0
  %1201 = vmatprep.subr.mxu0 0.0
  %1202 = vmatpush1.msra.mxu0 0.0
  %1203 = vmatprep.subr.mxu0 0.0
  %1204 = vmatpush1.msra.mxu0 0.0
  %1205 = vmatprep.subr.mxu0 0.0
  %1206 = vmatpush1.msra.mxu0 0.0
  %1207 = vmatprep.subr.mxu0 0.0
  %1208 = vmatpush1.msra.mxu0 0.0
  %1209 = vmatprep.subr.mxu0 0.0
  %1210 = vmatpush1.msra.mxu0 0.0
  %1211 = vmatprep.subr.mxu0 0.0
  %1212 = vmatpush1.msra.mxu0 0.0
  %1213 = vmatprep.mubr.f32.mxu0 0.0
  %1214 = vmatmul.mubr.f32.gmra.mrb[0].mxu0 %v1064
  %v1215 = vpop.f32.mrb[0].mxu0
  %v1216 = vadd.f32 0.0, %v1215
  %v1217 = vpop.f32.mrb[0].mxu0
  %v1218 = vadd.f32 0.0, %v1217
  %1219 = vdwg.mxu0
  %1220 = vmatprep.subr.mxu0 %v1076
  %1221 = vmatpush1.msra.mxu0 %v1074
  %1222 = vmatprep.subr.mxu0 0.0
  %1223 = vmatpush1.msra.mxu0 0.0
  %1224 = vmatprep.subr.mxu0 0.0
  %1225 = vmatpush1.msra.mxu0 0.0
  %1226 = vmatprep.subr.mxu0 0.0
  %1227 = vmatpush1.msra.mxu0 0.0
  %1228 = vmatprep.subr.mxu0 0.0
  %1229 = vmatpush1.msra.mxu0 0.0
  %1230 = vmatprep.subr.mxu0 0.0
  %1231 = vmatpush1.msra.mxu0 0.0
  %1232 = vmatprep.subr.mxu0 0.0
  %1233 = vmatpush1.msra.mxu0 0.0
  %1234 = vmatprep.subr.mxu0 0.0
  %1235 = vmatpush1.msra.mxu0 0.0
  %1236 = vmatprep.subr.mxu0 0.0
  %1237 = vmatpush1.msra.mxu0 0.0
  %1238 = vmatprep.subr.mxu0 0.0
  %1239 = vmatpush1.msra.mxu0 0.0
  %1240 = vmatprep.subr.mxu0 0.0
  %1241 = vmatpush1.msra.mxu0 0.0
  %1242 = vmatprep.subr.mxu0 0.0
  %1243 = vmatpush1.msra.mxu0 0.0
  %1244 = vmatprep.subr.mxu0 0.0
  %1245 = vmatpush1.msra.mxu0 0.0
  %1246 = vmatprep.subr.mxu0 0.0
  %1247 = vmatpush1.msra.mxu0 0.0
  %1248 = vmatprep.subr.mxu0 0.0
  %1249 = vmatpush1.msra.mxu0 0.0
  %1250 = vmatprep.subr.mxu0 0.0
  %1251 = vmatpush1.msra.mxu0 0.0
  %1252 = vmatprep.subr.mxu0 0.0
  %1253 = vmatpush1.msra.mxu0 0.0
  %1254 = vmatprep.subr.mxu0 0.0
  %1255 = vmatpush1.msra.mxu0 0.0
  %1256 = vmatprep.subr.mxu0 0.0
  %1257 = vmatpush1.msra.mxu0 0.0
  %1258 = vmatprep.subr.mxu0 0.0
  %1259 = vmatpush1.msra.mxu0 0.0
  %1260 = vmatprep.subr.mxu0 0.0
  %1261 = vmatpush1.msra.mxu0 0.0
  %1262 = vmatprep.subr.mxu0 0.0
  %1263 = vmatpush1.msra.mxu0 0.0
  %1264 = vmatprep.subr.mxu0 0.0
  %1265 = vmatpush1.msra.mxu0 0.0
  %1266 = vmatprep.subr.mxu0 0.0
  %1267 = vmatpush1.msra.mxu0 0.0
  %1268 = vmatprep.subr.mxu0 0.0
  %1269 = vmatpush1.msra.mxu0 0.0
  %1270 = vmatprep.subr.mxu0 0.0
  %1271 = vmatpush1.msra.mxu0 0.0
  %1272 = vmatprep.subr.mxu0 0.0
  %1273 = vmatpush1.msra.mxu0 0.0
  %1274 = vmatprep.subr.mxu0 0.0
  %1275 = vmatpush1.msra.mxu0 0.0
  %1276 = vmatprep.subr.mxu0 0.0
  %1277 = vmatpush1.msra.mxu0 0.0
  %1278 = vmatprep.subr.mxu0 0.0
  %1279 = vmatpush1.msra.mxu0 0.0
  %1280 = vmatprep.subr.mxu0 0.0
  %1281 = vmatpush1.msra.mxu0 0.0
  %1282 = vmatprep.subr.mxu0 0.0
  %1283 = vmatpush1.msra.mxu0 0.0
  %1284 = vmatprep.mubr.f32.mxu0 0.0
  %1285 = vmatmul.mubr.f32.gmra.mrb[0].mxu0 %v1064
  %v1286 = vpop.f32.mrb[0].mxu0
  %v1287 = vadd.f32 0.0, %v1286
  %v1288 = vpop.f32.mrb[0].mxu0
  %v1289 = vadd.f32 0.0, %v1288
  %1290 = vdwg.mxu0
  %v1291 = vadd.f32 %v1028, %v1145
  %v1292 = vadd.f32 %v1029, %v1147
  %v1293 = vadd.f32 %v1030, %v1216
  %v1294 = vadd.f32 %v1031, %v1218
  %v1295 = vadd.f32 %v1032, %v1287
  %v1296 = vadd.f32 %v1033, %v1289
  %v1297 = vld [vmem:[%s0] sm:$0xff]
  %v1298 = vld [vmem:[%s0 + $0x8] sm:$0xff]
  %v1299 = vld [vmem:[%s0 + $0x10] sm:$0xff]
  %s1300 = scalar_lea.vmem %s1, 40
  %v1301 = vld [vmem:[%s1300] sm:$0xff]
  %v1305 = vcombine.high %v1297, %v1297
  %v1306 = vcombine.high %v1298, %v1298
  %v1307 = vcombine.high %v1299, %v1299
  %1308 = vrot.lane.b32.xlu0 %v1297, 108
  %v1309 = vpop.permute.xlu0 %1308
  %1310 = vrot.lane.b32.xlu0 %v1305, 108
  %v1311 = vpop.permute.xlu0 %1310
  %1312 = vrot.lane.b32.xlu0 %v1298, 108
  %v1313 = vpop.permute.xlu0 %1312
  %1314 = vrot.lane.b32.xlu0 %v1306, 108
  %v1315 = vpop.permute.xlu0 %1314
  %1316 = vrot.lane.b32.xlu0 %v1299, 108
  %v1317 = vpop.permute.xlu0 %1316
  %1318 = vrot.lane.b32.xlu0 %v1307, 108
  %v1319 = vpop.permute.xlu0 %1318
  %vm1320 = vcmask 883712
  %v1321 = vsel %vm1320, %v1309, %v1311
  %v1322 = vsel %vm1320, %v1311, %v1313
  %v1323 = vsel %vm1320, %v1313, %v1315
  %v1324 = vsel %vm1320, %v1315, %v1317
  %v1325 = vsel %vm1320, %v1317, %v1319
  %v1327 = vsel %vm50, %v1301, 0
  %v1329 = vsel %vm54, %v1321, 0
  %v1331 = vsel %vm54, %v1322, 0
  %v1333 = vsel %vm54, %v1323, 0
  %v1335 = vsel %vm54, %v1324, 0
  %v1337 = vsel %vm54, %v1325, 0
  %v1339 = vsel %vm54, %v1319, 0
  %1341 = vmatprep.subr.mxu0 %v1331
  %1342 = vmatpush1.msra.mxu0 %v1329
  %1343 = vmatprep.subr.mxu0 0.0
  %1344 = vmatpush1.msra.mxu0 0.0
  %1345 = vmatprep.subr.mxu0 0.0
  %1346 = vmatpush1.msra.mxu0 0.0
  %1347 = vmatprep.subr.mxu0 0.0
  %1348 = vmatpush1.msra.mxu0 0.0
  %1349 = vmatprep.subr.mxu0 0.0
  %1350 = vmatpush1.msra.mxu0 0.0
  %1351 = vmatprep.subr.mxu0 0.0
  %1352 = vmatpush1.msra.mxu0 0.0
  %1353 = vmatprep.subr.mxu0 0.0
  %1354 = vmatpush1.msra.mxu0 0.0
  %1355 = vmatprep.subr.mxu0 0.0
  %1356 = vmatpush1.msra.mxu0 0.0
  %1357 = vmatprep.subr.mxu0 0.0
  %1358 = vmatpush1.msra.mxu0 0.0
  %1359 = vmatprep.subr.mxu0 0.0
  %1360 = vmatpush1.msra.mxu0 0.0
  %1361 = vmatprep.subr.mxu0 0.0
  %1362 = vmatpush1.msra.mxu0 0.0
  %1363 = vmatprep.subr.mxu0 0.0
  %1364 = vmatpush1.msra.mxu0 0.0
  %1365 = vmatprep.subr.mxu0 0.0
  %1366 = vmatpush1.msra.mxu0 0.0
  %1367 = vmatprep.subr.mxu0 0.0
  %1368 = vmatpush1.msra.mxu0 0.0
  %1369 = vmatprep.subr.mxu0 0.0
  %1370 = vmatpush1.msra.mxu0 0.0
  %1371 = vmatprep.subr.mxu0 0.0
  %1372 = vmatpush1.msra.mxu0 0.0
  %1373 = vmatprep.subr.mxu0 0.0
  %1374 = vmatpush1.msra.mxu0 0.0
  %1375 = vmatprep.subr.mxu0 0.0
  %1376 = vmatpush1.msra.mxu0 0.0
  %1377 = vmatprep.subr.mxu0 0.0
  %1378 = vmatpush1.msra.mxu0 0.0
  %1379 = vmatprep.subr.mxu0 0.0
  %1380 = vmatpush1.msra.mxu0 0.0
  %1381 = vmatprep.subr.mxu0 0.0
  %1382 = vmatpush1.msra.mxu0 0.0
  %1383 = vmatprep.subr.mxu0 0.0
  %1384 = vmatpush1.msra.mxu0 0.0
  %1385 = vmatprep.subr.mxu0 0.0
  %1386 = vmatpush1.msra.mxu0 0.0
  %1387 = vmatprep.subr.mxu0 0.0
  %1388 = vmatpush1.msra.mxu0 0.0
  %1389 = vmatprep.subr.mxu0 0.0
  %1390 = vmatpush1.msra.mxu0 0.0
  %1391 = vmatprep.subr.mxu0 0.0
  %1392 = vmatpush1.msra.mxu0 0.0
  %1393 = vmatprep.subr.mxu0 0.0
  %1394 = vmatpush1.msra.mxu0 0.0
  %1395 = vmatprep.subr.mxu0 0.0
  %1396 = vmatpush1.msra.mxu0 0.0
  %1397 = vmatprep.subr.mxu0 0.0
  %1398 = vmatpush1.msra.mxu0 0.0
  %1399 = vmatprep.subr.mxu0 0.0
  %1400 = vmatpush1.msra.mxu0 0.0
  %1401 = vmatprep.subr.mxu0 0.0
  %1402 = vmatpush1.msra.mxu0 0.0
  %1403 = vmatprep.subr.mxu0 0.0
  %1404 = vmatpush1.msra.mxu0 0.0
  %1405 = vmatprep.mubr.f32.mxu0 0.0
  %1406 = vmatmul.mubr.f32.gmra.mrb[0].mxu0 %v1327
  %v1407 = vpop.f32.mrb[0].mxu0
  %v1408 = vadd.f32 0.0, %v1407
  %v1409 = vpop.f32.mrb[0].mxu0
  %v1410 = vadd.f32 0.0, %v1409
  %1411 = vdwg.mxu0
  %1412 = vmatprep.subr.mxu0 %v1335
  %1413 = vmatpush1.msra.mxu0 %v1333
  %1414 = vmatprep.subr.mxu0 0.0
  %1415 = vmatpush1.msra.mxu0 0.0
  %1416 = vmatprep.subr.mxu0 0.0
  %1417 = vmatpush1.msra.mxu0 0.0
  %1418 = vmatprep.subr.mxu0 0.0
  %1419 = vmatpush1.msra.mxu0 0.0
  %1420 = vmatprep.subr.mxu0 0.0
  %1421 = vmatpush1.msra.mxu0 0.0
  %1422 = vmatprep.subr.mxu0 0.0
  %1423 = vmatpush1.msra.mxu0 0.0
  %1424 = vmatprep.subr.mxu0 0.0
  %1425 = vmatpush1.msra.mxu0 0.0
  %1426 = vmatprep.subr.mxu0 0.0
  %1427 = vmatpush1.msra.mxu0 0.0
  %1428 = vmatprep.subr.mxu0 0.0
  %1429 = vmatpush1.msra.mxu0 0.0
  %1430 = vmatprep.subr.mxu0 0.0
  %1431 = vmatpush1.msra.mxu0 0.0
  %1432 = vmatprep.subr.mxu0 0.0
  %1433 = vmatpush1.msra.mxu0 0.0
  %1434 = vmatprep.subr.mxu0 0.0
  %1435 = vmatpush1.msra.mxu0 0.0
  %1436 = vmatprep.subr.mxu0 0.0
  %1437 = vmatpush1.msra.mxu0 0.0
  %1438 = vmatprep.subr.mxu0 0.0
  %1439 = vmatpush1.msra.mxu0 0.0
  %1440 = vmatprep.subr.mxu0 0.0
  %1441 = vmatpush1.msra.mxu0 0.0
  %1442 = vmatprep.subr.mxu0 0.0
  %1443 = vmatpush1.msra.mxu0 0.0
  %1444 = vmatprep.subr.mxu0 0.0
  %1445 = vmatpush1.msra.mxu0 0.0
  %1446 = vmatprep.subr.mxu0 0.0
  %1447 = vmatpush1.msra.mxu0 0.0
  %1448 = vmatprep.subr.mxu0 0.0
  %1449 = vmatpush1.msra.mxu0 0.0
  %1450 = vmatprep.subr.mxu0 0.0
  %1451 = vmatpush1.msra.mxu0 0.0
  %1452 = vmatprep.subr.mxu0 0.0
  %1453 = vmatpush1.msra.mxu0 0.0
  %1454 = vmatprep.subr.mxu0 0.0
  %1455 = vmatpush1.msra.mxu0 0.0
  %1456 = vmatprep.subr.mxu0 0.0
  %1457 = vmatpush1.msra.mxu0 0.0
  %1458 = vmatprep.subr.mxu0 0.0
  %1459 = vmatpush1.msra.mxu0 0.0
  %1460 = vmatprep.subr.mxu0 0.0
  %1461 = vmatpush1.msra.mxu0 0.0
  %1462 = vmatprep.subr.mxu0 0.0
  %1463 = vmatpush1.msra.mxu0 0.0
  %1464 = vmatprep.subr.mxu0 0.0
  %1465 = vmatpush1.msra.mxu0 0.0
  %1466 = vmatprep.subr.mxu0 0.0
  %1467 = vmatpush1.msra.mxu0 0.0
  %1468 = vmatprep.subr.mxu0 0.0
  %1469 = vmatpush1.msra.mxu0 0.0
  %1470 = vmatprep.subr.mxu0 0.0
  %1471 = vmatpush1.msra.mxu0 0.0
  %1472 = vmatprep.subr.mxu0 0.0
  %1473 = vmatpush1.msra.mxu0 0.0
  %1474 = vmatprep.subr.mxu0 0.0
  %1475 = vmatpush1.msra.mxu0 0.0
  %1476 = vmatprep.mubr.f32.mxu0 0.0
  %1477 = vmatmul.mubr.f32.gmra.mrb[0].mxu0 %v1327
  %v1478 = vpop.f32.mrb[0].mxu0
  %v1479 = vadd.f32 0.0, %v1478
  %v1480 = vpop.f32.mrb[0].mxu0
  %v1481 = vadd.f32 0.0, %v1480
  %1482 = vdwg.mxu0
  %1483 = vmatprep.subr.mxu0 %v1339
  %1484 = vmatpush1.msra.mxu0 %v1337
  %1485 = vmatprep.subr.mxu0 0.0
  %1486 = vmatpush1.msra.mxu0 0.0
  %1487 = vmatprep.subr.mxu0 0.0
  %1488 = vmatpush1.msra.mxu0 0.0
  %1489 = vmatprep.subr.mxu0 0.0
  %1490 = vmatpush1.msra.mxu0 0.0
  %1491 = vmatprep.subr.mxu0 0.0
  %1492 = vmatpush1.msra.mxu0 0.0
  %1493 = vmatprep.subr.mxu0 0.0
  %1494 = vmatpush1.msra.mxu0 0.0
  %1495 = vmatprep.subr.mxu0 0.0
  %1496 = vmatpush1.msra.mxu0 0.0
  %1497 = vmatprep.subr.mxu0 0.0
  %1498 = vmatpush1.msra.mxu0 0.0
  %1499 = vmatprep.subr.mxu0 0.0
  %1500 = vmatpush1.msra.mxu0 0.0
  %1501 = vmatprep.subr.mxu0 0.0
  %1502 = vmatpush1.msra.mxu0 0.0
  %1503 = vmatprep.subr.mxu0 0.0
  %1504 = vmatpush1.msra.mxu0 0.0
  %1505 = vmatprep.subr.mxu0 0.0
  %1506 = vmatpush1.msra.mxu0 0.0
  %1507 = vmatprep.subr.mxu0 0.0
  %1508 = vmatpush1.msra.mxu0 0.0
  %1509 = vmatprep.subr.mxu0 0.0
  %1510 = vmatpush1.msra.mxu0 0.0
  %1511 = vmatprep.subr.mxu0 0.0
  %1512 = vmatpush1.msra.mxu0 0.0
  %1513 = vmatprep.subr.mxu0 0.0
  %1514 = vmatpush1.msra.mxu0 0.0
  %1515 = vmatprep.subr.mxu0 0.0
  %1516 = vmatpush1.msra.mxu0 0.0
  %1517 = vmatprep.subr.mxu0 0.0
  %1518 = vmatpush1.msra.mxu0 0.0
  %1519 = vmatprep.subr.mxu0 0.0
  %1520 = vmatpush1.msra.mxu0 0.0
  %1521 = vmatprep.subr.mxu0 0.0
  %1522 = vmatpush1.msra.mxu0 0.0
  %1523 = vmatprep.subr.mxu0 0.0
  %1524 = vmatpush1.msra.mxu0 0.0
  %1525 = vmatprep.subr.mxu0 0.0
  %1526 = vmatpush1.msra.mxu0 0.0
  %1527 = vmatprep.subr.mxu0 0.0
  %1528 = vmatpush1.msra.mxu0 0.0
  %1529 = vmatprep.subr.mxu0 0.0
  %1530 = vmatpush1.msra.mxu0 0.0
  %1531 = vmatprep.subr.mxu0 0.0
  %1532 = vmatpush1.msra.mxu0 0.0
  %1533 = vmatprep.subr.mxu0 0.0
  %1534 = vmatpush1.msra.mxu0 0.0
  %1535 = vmatprep.subr.mxu0 0.0
  %1536 = vmatpush1.msra.mxu0 0.0
  %1537 = vmatprep.subr.mxu0 0.0
  %1538 = vmatpush1.msra.mxu0 0.0
  %1539 = vmatprep.subr.mxu0 0.0
  %1540 = vmatpush1.msra.mxu0 0.0
  %1541 = vmatprep.subr.mxu0 0.0
  %1542 = vmatpush1.msra.mxu0 0.0
  %1543 = vmatprep.subr.mxu0 0.0
  %1544 = vmatpush1.msra.mxu0 0.0
  %1545 = vmatprep.subr.mxu0 0.0
  %1546 = vmatpush1.msra.mxu0 0.0
  %1547 = vmatprep.mubr.f32.mxu0 0.0
  %1548 = vmatmul.mubr.f32.gmra.mrb[0].mxu0 %v1327
  %v1549 = vpop.f32.mrb[0].mxu0
  %v1550 = vadd.f32 0.0, %v1549
  %v1551 = vpop.f32.mrb[0].mxu0
  %v1552 = vadd.f32 0.0, %v1551
  %1553 = vdwg.mxu0
  %v1554 = vadd.f32 %v1291, %v1408
  %v1555 = vadd.f32 %v1292, %v1410
  %v1556 = vadd.f32 %v1293, %v1479
  %v1557 = vadd.f32 %v1294, %v1481
  %v1558 = vadd.f32 %v1295, %v1550
  %v1559 = vadd.f32 %v1296, %v1552
  %v1560 = vld [vmem:[%s0] sm:$0xff]
  %v1561 = vld [vmem:[%s0 + $0x8] sm:$0xff]
  %v1562 = vld [vmem:[%s0 + $0x10] sm:$0xff]
  %s1563 = scalar_lea.vmem %s1, 48
  %v1564 = vld [vmem:[%s1563] sm:$0xff]
  %v1568 = vcombine.high %v1560, %v1560
  %v1569 = vcombine.high %v1561, %v1561
  %v1570 = vcombine.high %v1562, %v1562
  %1571 = vrot.lane.b32.xlu0 %v1560, 92
  %v1572 = vpop.permute.xlu0 %1571
  %1573 = vrot.lane.b32.xlu0 %v1568, 92
  %v1574 = vpop.permute.xlu0 %1573
  %1575 = vrot.lane.b32.xlu0 %v1561, 92
  %v1576 = vpop.permute.xlu0 %1575
  %1577 = vrot.lane.b32.xlu0 %v1569, 92
  %v1578 = vpop.permute.xlu0 %1577
  %1579 = vrot.lane.b32.xlu0 %v1562, 92
  %v1580 = vpop.permute.xlu0 %1579
  %1581 = vrot.lane.b32.xlu0 %v1570, 92
  %v1582 = vpop.permute.xlu0 %1581
  %vm1583 = vcmask 752640
  %v1584 = vsel %vm1583, %v1572, %v1574
  %v1585 = vsel %vm1583, %v1574, %v1576
  %v1586 = vsel %vm1583, %v1576, %v1578
  %v1587 = vsel %vm1583, %v1578, %v1580
  %v1588 = vsel %vm1583, %v1580, %v1582
  %v1590 = vsel %vm50, %v1564, 0
  %v1592 = vsel %vm54, %v1584, 0
  %v1594 = vsel %vm54, %v1585, 0
  %v1596 = vsel %vm54, %v1586, 0
  %v1598 = vsel %vm54, %v1587, 0
  %v1600 = vsel %vm54, %v1588, 0
  %v1602 = vsel %vm54, %v1582, 0
  %1604 = vmatprep.subr.mxu0 %v1594
  %1605 = vmatpush1.msra.mxu0 %v1592
  %1606 = vmatprep.subr.mxu0 0.0
  %1607 = vmatpush1.msra.mxu0 0.0
  %1608 = vmatprep.subr.mxu0 0.0
  %1609 = vmatpush1.msra.mxu0 0.0
  %1610 = vmatprep.subr.mxu0 0.0
  %1611 = vmatpush1.msra.mxu0 0.0
  %1612 = vmatprep.subr.mxu0 0.0
  %1613 = vmatpush1.msra.mxu0 0.0
  %1614 = vmatprep.subr.mxu0 0.0
  %1615 = vmatpush1.msra.mxu0 0.0
  %1616 = vmatprep.subr.mxu0 0.0
  %1617 = vmatpush1.msra.mxu0 0.0
  %1618 = vmatprep.subr.mxu0 0.0
  %1619 = vmatpush1.msra.mxu0 0.0
  %1620 = vmatprep.subr.mxu0 0.0
  %1621 = vmatpush1.msra.mxu0 0.0
  %1622 = vmatprep.subr.mxu0 0.0
  %1623 = vmatpush1.msra.mxu0 0.0
  %1624 = vmatprep.subr.mxu0 0.0
  %1625 = vmatpush1.msra.mxu0 0.0
  %1626 = vmatprep.subr.mxu0 0.0
  %1627 = vmatpush1.msra.mxu0 0.0
  %1628 = vmatprep.subr.mxu0 0.0
  %1629 = vmatpush1.msra.mxu0 0.0
  %1630 = vmatprep.subr.mxu0 0.0
  %1631 = vmatpush1.msra.mxu0 0.0
  %1632 = vmatprep.subr.mxu0 0.0
  %1633 = vmatpush1.msra.mxu0 0.0
  %1634 = vmatprep.subr.mxu0 0.0
  %1635 = vmatpush1.msra.mxu0 0.0
  %1636 = vmatprep.subr.mxu0 0.0
  %1637 = vmatpush1.msra.mxu0 0.0
  %1638 = vmatprep.subr.mxu0 0.0
  %1639 = vmatpush1.msra.mxu0 0.0
  %1640 = vmatprep.subr.mxu0 0.0
  %1641 = vmatpush1.msra.mxu0 0.0
  %1642 = vmatprep.subr.mxu0 0.0
  %1643 = vmatpush1.msra.mxu0 0.0
  %1644 = vmatprep.subr.mxu0 0.0
  %1645 = vmatpush1.msra.mxu0 0.0
  %1646 = vmatprep.subr.mxu0 0.0
  %1647 = vmatpush1.msra.mxu0 0.0
  %1648 = vmatprep.subr.mxu0 0.0
  %1649 = vmatpush1.msra.mxu0 0.0
  %1650 = vmatprep.subr.mxu0 0.0
  %1651 = vmatpush1.msra.mxu0 0.0
  %1652 = vmatprep.subr.mxu0 0.0
  %1653 = vmatpush1.msra.mxu0 0.0
  %1654 = vmatprep.subr.mxu0 0.0
  %1655 = vmatpush1.msra.mxu0 0.0
  %1656 = vmatprep.subr.mxu0 0.0
  %1657 = vmatpush1.msra.mxu0 0.0
  %1658 = vmatprep.subr.mxu0 0.0
  %1659 = vmatpush1.msra.mxu0 0.0
  %1660 = vmatprep.subr.mxu0 0.0
  %1661 = vmatpush1.msra.mxu0 0.0
  %1662 = vmatprep.subr.mxu0 0.0
  %1663 = vmatpush1.msra.mxu0 0.0
  %1664 = vmatprep.subr.mxu0 0.0
  %1665 = vmatpush1.msra.mxu0 0.0
  %1666 = vmatprep.subr.mxu0 0.0
  %1667 = vmatpush1.msra.mxu0 0.0
  %1668 = vmatprep.mubr.f32.mxu0 0.0
  %1669 = vmatmul.mubr.f32.gmra.mrb[0].mxu0 %v1590
  %v1670 = vpop.f32.mrb[0].mxu0
  %v1671 = vadd.f32 0.0, %v1670
  %v1672 = vpop.f32.mrb[0].mxu0
  %v1673 = vadd.f32 0.0, %v1672
  %1674 = vdwg.mxu0
  %1675 = vmatprep.subr.mxu0 %v1598
  %1676 = vmatpush1.msra.mxu0 %v1596
  %1677 = vmatprep.subr.mxu0 0.0
  %1678 = vmatpush1.msra.mxu0 0.0
  %1679 = vmatprep.subr.mxu0 0.0
  %1680 = vmatpush1.msra.mxu0 0.0
  %1681 = vmatprep.subr.mxu0 0.0
  %1682 = vmatpush1.msra.mxu0 0.0
  %1683 = vmatprep.subr.mxu0 0.0
  %1684 = vmatpush1.msra.mxu0 0.0
  %1685 = vmatprep.subr.mxu0 0.0
  %1686 = vmatpush1.msra.mxu0 0.0
  %1687 = vmatprep.subr.mxu0 0.0
  %1688 = vmatpush1.msra.mxu0 0.0
  %1689 = vmatprep.subr.mxu0 0.0
  %1690 = vmatpush1.msra.mxu0 0.0
  %1691 = vmatprep.subr.mxu0 0.0
  %1692 = vmatpush1.msra.mxu0 0.0
  %1693 = vmatprep.subr.mxu0 0.0
  %1694 = vmatpush1.msra.mxu0 0.0
  %1695 = vmatprep.subr.mxu0 0.0
  %1696 = vmatpush1.msra.mxu0 0.0
  %1697 = vmatprep.subr.mxu0 0.0
  %1698 = vmatpush1.msra.mxu0 0.0
  %1699 = vmatprep.subr.mxu0 0.0
  %1700 = vmatpush1.msra.mxu0 0.0
  %1701 = vmatprep.subr.mxu0 0.0
  %1702 = vmatpush1.msra.mxu0 0.0
  %1703 = vmatprep.subr.mxu0 0.0
  %1704 = vmatpush1.msra.mxu0 0.0
  %1705 = vmatprep.subr.mxu0 0.0
  %1706 = vmatpush1.msra.mxu0 0.0
  %1707 = vmatprep.subr.mxu0 0.0
  %1708 = vmatpush1.msra.mxu0 0.0
  %1709 = vmatprep.subr.mxu0 0.0
  %1710 = vmatpush1.msra.mxu0 0.0
  %1711 = vmatprep.subr.mxu0 0.0
  %1712 = vmatpush1.msra.mxu0 0.0
  %1713 = vmatprep.subr.mxu0 0.0
  %1714 = vmatpush1.msra.mxu0 0.0
  %1715 = vmatprep.subr.mxu0 0.0
  %1716 = vmatpush1.msra.mxu0 0.0
  %1717 = vmatprep.subr.mxu0 0.0
  %1718 = vmatpush1.msra.mxu0 0.0
  %1719 = vmatprep.subr.mxu0 0.0
  %1720 = vmatpush1.msra.mxu0 0.0
  %1721 = vmatprep.subr.mxu0 0.0
  %1722 = vmatpush1.msra.mxu0 0.0
  %1723 = vmatprep.subr.mxu0 0.0
  %1724 = vmatpush1.msra.mxu0 0.0
  %1725 = vmatprep.subr.mxu0 0.0
  %1726 = vmatpush1.msra.mxu0 0.0
  %1727 = vmatprep.subr.mxu0 0.0
  %1728 = vmatpush1.msra.mxu0 0.0
  %1729 = vmatprep.subr.mxu0 0.0
  %1730 = vmatpush1.msra.mxu0 0.0
  %1731 = vmatprep.subr.mxu0 0.0
  %1732 = vmatpush1.msra.mxu0 0.0
  %1733 = vmatprep.subr.mxu0 0.0
  %1734 = vmatpush1.msra.mxu0 0.0
  %1735 = vmatprep.subr.mxu0 0.0
  %1736 = vmatpush1.msra.mxu0 0.0
  %1737 = vmatprep.subr.mxu0 0.0
  %1738 = vmatpush1.msra.mxu0 0.0
  %1739 = vmatprep.mubr.f32.mxu0 0.0
  %1740 = vmatmul.mubr.f32.gmra.mrb[0].mxu0 %v1590
  %v1741 = vpop.f32.mrb[0].mxu0
  %v1742 = vadd.f32 0.0, %v1741
  %v1743 = vpop.f32.mrb[0].mxu0
  %v1744 = vadd.f32 0.0, %v1743
  %1745 = vdwg.mxu0
  %1746 = vmatprep.subr.mxu0 %v1602
  %1747 = vmatpush1.msra.mxu0 %v1600
  %1748 = vmatprep.subr.mxu0 0.0
  %1749 = vmatpush1.msra.mxu0 0.0
  %1750 = vmatprep.subr.mxu0 0.0
  %1751 = vmatpush1.msra.mxu0 0.0
  %1752 = vmatprep.subr.mxu0 0.0
  %1753 = vmatpush1.msra.mxu0 0.0
  %1754 = vmatprep.subr.mxu0 0.0
  %1755 = vmatpush1.msra.mxu0 0.0
  %1756 = vmatprep.subr.mxu0 0.0
  %1757 = vmatpush1.msra.mxu0 0.0
  %1758 = vmatprep.subr.mxu0 0.0
  %1759 = vmatpush1.msra.mxu0 0.0
  %1760 = vmatprep.subr.mxu0 0.0
  %1761 = vmatpush1.msra.mxu0 0.0
  %1762 = vmatprep.subr.mxu0 0.0
  %1763 = vmatpush1.msra.mxu0 0.0
  %1764 = vmatprep.subr.mxu0 0.0
  %1765 = vmatpush1.msra.mxu0 0.0
  %1766 = vmatprep.subr.mxu0 0.0
  %1767 = vmatpush1.msra.mxu0 0.0
  %1768 = vmatprep.subr.mxu0 0.0
  %1769 = vmatpush1.msra.mxu0 0.0
  %1770 = vmatprep.subr.mxu0 0.0
  %1771 = vmatpush1.msra.mxu0 0.0
  %1772 = vmatprep.subr.mxu0 0.0
  %1773 = vmatpush1.msra.mxu0 0.0
  %1774 = vmatprep.subr.mxu0 0.0
  %1775 = vmatpush1.msra.mxu0 0.0
  %1776 = vmatprep.subr.mxu0 0.0
  %1777 = vmatpush1.msra.mxu0 0.0
  %1778 = vmatprep.subr.mxu0 0.0
  %1779 = vmatpush1.msra.mxu0 0.0
  %1780 = vmatprep.subr.mxu0 0.0
  %1781 = vmatpush1.msra.mxu0 0.0
  %1782 = vmatprep.subr.mxu0 0.0
  %1783 = vmatpush1.msra.mxu0 0.0
  %1784 = vmatprep.subr.mxu0 0.0
  %1785 = vmatpush1.msra.mxu0 0.0
  %1786 = vmatprep.subr.mxu0 0.0
  %1787 = vmatpush1.msra.mxu0 0.0
  %1788 = vmatprep.subr.mxu0 0.0
  %1789 = vmatpush1.msra.mxu0 0.0
  %1790 = vmatprep.subr.mxu0 0.0
  %1791 = vmatpush1.msra.mxu0 0.0
  %1792 = vmatprep.subr.mxu0 0.0
  %1793 = vmatpush1.msra.mxu0 0.0
  %1794 = vmatprep.subr.mxu0 0.0
  %1795 = vmatpush1.msra.mxu0 0.0
  %1796 = vmatprep.subr.mxu0 0.0
  %1797 = vmatpush1.msra.mxu0 0.0
  %1798 = vmatprep.subr.mxu0 0.0
  %1799 = vmatpush1.msra.mxu0 0.0
  %1800 = vmatprep.subr.mxu0 0.0
  %1801 = vmatpush1.msra.mxu0 0.0
  %1802 = vmatprep.subr.mxu0 0.0
  %1803 = vmatpush1.msra.mxu0 0.0
  %1804 = vmatprep.subr.mxu0 0.0
  %1805 = vmatpush1.msra.mxu0 0.0
  %1806 = vmatprep.subr.mxu0 0.0
  %1807 = vmatpush1.msra.mxu0 0.0
  %1808 = vmatprep.subr.mxu0 0.0
  %1809 = vmatpush1.msra.mxu0 0.0
  %1810 = vmatprep.mubr.f32.mxu0 0.0
  %1811 = vmatmul.mubr.f32.gmra.mrb[0].mxu0 %v1590
  %v1812 = vpop.f32.mrb[0].mxu0
  %v1813 = vadd.f32 0.0, %v1812
  %v1814 = vpop.f32.mrb[0].mxu0
  %v1815 = vadd.f32 0.0, %v1814
  %1816 = vdwg.mxu0
  %v1817 = vadd.f32 %v1554, %v1671
  %v1818 = vadd.f32 %v1555, %v1673
  %v1819 = vadd.f32 %v1556, %v1742
  %v1820 = vadd.f32 %v1557, %v1744
  %v1821 = vadd.f32 %v1558, %v1813
  %v1822 = vadd.f32 %v1559, %v1815
  %v1823 = vld [vmem:[%s0] sm:$0xff]
  %v1824 = vld [vmem:[%s0 + $0x8] sm:$0xff]
  %v1825 = vld [vmem:[%s0 + $0x10] sm:$0xff]
  %s1826 = scalar_lea.vmem %s1, 56
  %v1827 = vld [vmem:[%s1826] sm:$0xff]
  %v1831 = vcombine.high %v1823, %v1823
  %v1832 = vcombine.high %v1824, %v1824
  %v1833 = vcombine.high %v1825, %v1825
  %1834 = vrot.lane.b32.xlu0 %v1823, 91
  %v1835 = vpop.permute.xlu0 %1834
  %1836 = vrot.lane.b32.xlu0 %v1831, 91
  %v1837 = vpop.permute.xlu0 %1836
  %1838 = vrot.lane.b32.xlu0 %v1824, 91
  %v1839 = vpop.permute.xlu0 %1838
  %1840 = vrot.lane.b32.xlu0 %v1832, 91
  %v1841 = vpop.permute.xlu0 %1840
  %1842 = vrot.lane.b32.xlu0 %v1825, 91
  %v1843 = vpop.permute.xlu0 %1842
  %1844 = vrot.lane.b32.xlu0 %v1833, 91
  %v1845 = vpop.permute.xlu0 %1844
  %vm1846 = vcmask 744448
  %v1847 = vsel %vm1846, %v1835, %v1837
  %v1848 = vsel %vm1846, %v1837, %v1839
  %v1849 = vsel %vm1846, %v1839, %v1841
  %v1850 = vsel %vm1846, %v1841, %v1843
  %v1851 = vsel %vm1846, %v1843, %v1845
  %v1853 = vsel %vm50, %v1827, 0
  %v1855 = vsel %vm54, %v1847, 0
  %v1857 = vsel %vm54, %v1848, 0
  %v1859 = vsel %vm54, %v1849, 0
  %v1861 = vsel %vm54, %v1850, 0
  %v1863 = vsel %vm54, %v1851, 0
  %v1865 = vsel %vm54, %v1845, 0
  %1867 = vmatprep.subr.mxu0 %v1857
  %1868 = vmatpush1.msra.mxu0 %v1855
  %1869 = vmatprep.subr.mxu0 0.0
  %1870 = vmatpush1.msra.mxu0 0.0
  %1871 = vmatprep.subr.mxu0 0.0
  %1872 = vmatpush1.msra.mxu0 0.0
  %1873 = vmatprep.subr.mxu0 0.0
  %1874 = vmatpush1.msra.mxu0 0.0
  %1875 = vmatprep.subr.mxu0 0.0
  %1876 = vmatpush1.msra.mxu0 0.0
  %1877 = vmatprep.subr.mxu0 0.0
  %1878 = vmatpush1.msra.mxu0 0.0
  %1879 = vmatprep.subr.mxu0 0.0
  %1880 = vmatpush1.msra.mxu0 0.0
  %1881 = vmatprep.subr.mxu0 0.0
  %1882 = vmatpush1.msra.mxu0 0.0
  %1883 = vmatprep.subr.mxu0 0.0
  %1884 = vmatpush1.msra.mxu0 0.0
  %1885 = vmatprep.subr.mxu0 0.0
  %1886 = vmatpush1.msra.mxu0 0.0
  %1887 = vmatprep.subr.mxu0 0.0
  %1888 = vmatpush1.msra.mxu0 0.0
  %1889 = vmatprep.subr.mxu0 0.0
  %1890 = vmatpush1.msra.mxu0 0.0
  %1891 = vmatprep.subr.mxu0 0.0
  %1892 = vmatpush1.msra.mxu0 0.0
  %1893 = vmatprep.subr.mxu0 0.0
  %1894 = vmatpush1.msra.mxu0 0.0
  %1895 = vmatprep.subr.mxu0 0.0
  %1896 = vmatpush1.msra.mxu0 0.0
  %1897 = vmatprep.subr.mxu0 0.0
  %1898 = vmatpush1.msra.mxu0 0.0
  %1899 = vmatprep.subr.mxu0 0.0
  %1900 = vmatpush1.msra.mxu0 0.0
  %1901 = vmatprep.subr.mxu0 0.0
  %1902 = vmatpush1.msra.mxu0 0.0
  %1903 = vmatprep.subr.mxu0 0.0
  %1904 = vmatpush1.msra.mxu0 0.0
  %1905 = vmatprep.subr.mxu0 0.0
  %1906 = vmatpush1.msra.mxu0 0.0
  %1907 = vmatprep.subr.mxu0 0.0
  %1908 = vmatpush1.msra.mxu0 0.0
  %1909 = vmatprep.subr.mxu0 0.0
  %1910 = vmatpush1.msra.mxu0 0.0
  %1911 = vmatprep.subr.mxu0 0.0
  %1912 = vmatpush1.msra.mxu0 0.0
  %1913 = vmatprep.subr.mxu0 0.0
  %1914 = vmatpush1.msra.mxu0 0.0
  %1915 = vmatprep.subr.mxu0 0.0
  %1916 = vmatpush1.msra.mxu0 0.0
  %1917 = vmatprep.subr.mxu0 0.0
  %1918 = vmatpush1.msra.mxu0 0.0
  %1919 = vmatprep.subr.mxu0 0.0
  %1920 = vmatpush1.msra.mxu0 0.0
  %1921 = vmatprep.subr.mxu0 0.0
  %1922 = vmatpush1.msra.mxu0 0.0
  %1923 = vmatprep.subr.mxu0 0.0
  %1924 = vmatpush1.msra.mxu0 0.0
  %1925 = vmatprep.subr.mxu0 0.0
  %1926 = vmatpush1.msra.mxu0 0.0
  %1927 = vmatprep.subr.mxu0 0.0
  %1928 = vmatpush1.msra.mxu0 0.0
  %1929 = vmatprep.subr.mxu0 0.0
  %1930 = vmatpush1.msra.mxu0 0.0
  %1931 = vmatprep.mubr.f32.mxu0 0.0
  %1932 = vmatmul.mubr.f32.gmra.mrb[0].mxu0 %v1853
  %v1933 = vpop.f32.mrb[0].mxu0
  %v1934 = vadd.f32 0.0, %v1933
  %v1935 = vpop.f32.mrb[0].mxu0
  %v1936 = vadd.f32 0.0, %v1935
  %1937 = vdwg.mxu0
  %1938 = vmatprep.subr.mxu0 %v1861
  %1939 = vmatpush1.msra.mxu0 %v1859
  %1940 = vmatprep.subr.mxu0 0.0
  %1941 = vmatpush1.msra.mxu0 0.0
  %1942 = vmatprep.subr.mxu0 0.0
  %1943 = vmatpush1.msra.mxu0 0.0
  %1944 = vmatprep.subr.mxu0 0.0
  %1945 = vmatpush1.msra.mxu0 0.0
  %1946 = vmatprep.subr.mxu0 0.0
  %1947 = vmatpush1.msra.mxu0 0.0
  %1948 = vmatprep.subr.mxu0 0.0
  %1949 = vmatpush1.msra.mxu0 0.0
  %1950 = vmatprep.subr.mxu0 0.0
  %1951 = vmatpush1.msra.mxu0 0.0
  %1952 = vmatprep.subr.mxu0 0.0
  %1953 = vmatpush1.msra.mxu0 0.0
  %1954 = vmatprep.subr.mxu0 0.0
  %1955 = vmatpush1.msra.mxu0 0.0
  %1956 = vmatprep.subr.mxu0 0.0
  %1957 = vmatpush1.msra.mxu0 0.0
  %1958 = vmatprep.subr.mxu0 0.0
  %1959 = vmatpush1.msra.mxu0 0.0
  %1960 = vmatprep.subr.mxu0 0.0
  %1961 = vmatpush1.msra.mxu0 0.0
  %1962 = vmatprep.subr.mxu0 0.0
  %1963 = vmatpush1.msra.mxu0 0.0
  %1964 = vmatprep.subr.mxu0 0.0
  %1965 = vmatpush1.msra.mxu0 0.0
  %1966 = vmatprep.subr.mxu0 0.0
  %1967 = vmatpush1.msra.mxu0 0.0
  %1968 = vmatprep.subr.mxu0 0.0
  %1969 = vmatpush1.msra.mxu0 0.0
  %1970 = vmatprep.subr.mxu0 0.0
  %1971 = vmatpush1.msra.mxu0 0.0
  %1972 = vmatprep.subr.mxu0 0.0
  %1973 = vmatpush1.msra.mxu0 0.0
  %1974 = vmatprep.subr.mxu0 0.0
  %1975 = vmatpush1.msra.mxu0 0.0
  %1976 = vmatprep.subr.mxu0 0.0
  %1977 = vmatpush1.msra.mxu0 0.0
  %1978 = vmatprep.subr.mxu0 0.0
  %1979 = vmatpush1.msra.mxu0 0.0
  %1980 = vmatprep.subr.mxu0 0.0
  %1981 = vmatpush1.msra.mxu0 0.0
  %1982 = vmatprep.subr.mxu0 0.0
  %1983 = vmatpush1.msra.mxu0 0.0
  %1984 = vmatprep.subr.mxu0 0.0
  %1985 = vmatpush1.msra.mxu0 0.0
  %1986 = vmatprep.subr.mxu0 0.0
  %1987 = vmatpush1.msra.mxu0 0.0
  %1988 = vmatprep.subr.mxu0 0.0
  %1989 = vmatpush1.msra.mxu0 0.0
  %1990 = vmatprep.subr.mxu0 0.0
  %1991 = vmatpush1.msra.mxu0 0.0
  %1992 = vmatprep.subr.mxu0 0.0
  %1993 = vmatpush1.msra.mxu0 0.0
  %1994 = vmatprep.subr.mxu0 0.0
  %1995 = vmatpush1.msra.mxu0 0.0
  %1996 = vmatprep.subr.mxu0 0.0
  %1997 = vmatpush1.msra.mxu0 0.0
  %1998 = vmatprep.subr.mxu0 0.0
  %1999 = vmatpush1.msra.mxu0 0.0
  %2000 = vmatprep.subr.mxu0 0.0
  %2001 = vmatpush1.msra.mxu0 0.0
  %2002 = vmatprep.mubr.f32.mxu0 0.0
  %2003 = vmatmul.mubr.f32.gmra.mrb[0].mxu0 %v1853
  %v2004 = vpop.f32.mrb[0].mxu0
  %v2005 = vadd.f32 0.0, %v2004
  %v2006 = vpop.f32.mrb[0].mxu0
  %v2007 = vadd.f32 0.0, %v2006
  %2008 = vdwg.mxu0
  %2009 = vmatprep.subr.mxu0 %v1865
  %2010 = vmatpush1.msra.mxu0 %v1863
  %2011 = vmatprep.subr.mxu0 0.0
  %2012 = vmatpush1.msra.mxu0 0.0
  %2013 = vmatprep.subr.mxu0 0.0
  %2014 = vmatpush1.msra.mxu0 0.0
  %2015 = vmatprep.subr.mxu0 0.0
  %2016 = vmatpush1.msra.mxu0 0.0
  %2017 = vmatprep.subr.mxu0 0.0
  %2018 = vmatpush1.msra.mxu0 0.0
  %2019 = vmatprep.subr.mxu0 0.0
  %2020 = vmatpush1.msra.mxu0 0.0
  %2021 = vmatprep.subr.mxu0 0.0
  %2022 = vmatpush1.msra.mxu0 0.0
  %2023 = vmatprep.subr.mxu0 0.0
  %2024 = vmatpush1.msra.mxu0 0.0
  %2025 = vmatprep.subr.mxu0 0.0
  %2026 = vmatpush1.msra.mxu0 0.0
  %2027 = vmatprep.subr.mxu0 0.0
  %2028 = vmatpush1.msra.mxu0 0.0
  %2029 = vmatprep.subr.mxu0 0.0
  %2030 = vmatpush1.msra.mxu0 0.0
  %2031 = vmatprep.subr.mxu0 0.0
  %2032 = vmatpush1.msra.mxu0 0.0
  %2033 = vmatprep.subr.mxu0 0.0
  %2034 = vmatpush1.msra.mxu0 0.0
  %2035 = vmatprep.subr.mxu0 0.0
  %2036 = vmatpush1.msra.mxu0 0.0
  %2037 = vmatprep.subr.mxu0 0.0
  %2038 = vmatpush1.msra.mxu0 0.0
  %2039 = vmatprep.subr.mxu0 0.0
  %2040 = vmatpush1.msra.mxu0 0.0
  %2041 = vmatprep.subr.mxu0 0.0
  %2042 = vmatpush1.msra.mxu0 0.0
  %2043 = vmatprep.subr.mxu0 0.0
  %2044 = vmatpush1.msra.mxu0 0.0
  %2045 = vmatprep.subr.mxu0 0.0
  %2046 = vmatpush1.msra.mxu0 0.0
  %2047 = vmatprep.subr.mxu0 0.0
  %2048 = vmatpush1.msra.mxu0 0.0
  %2049 = vmatprep.subr.mxu0 0.0
  %2050 = vmatpush1.msra.mxu0 0.0
  %2051 = vmatprep.subr.mxu0 0.0
  %2052 = vmatpush1.msra.mxu0 0.0
  %2053 = vmatprep.subr.mxu0 0.0
  %2054 = vmatpush1.msra.mxu0 0.0
  %2055 = vmatprep.subr.mxu0 0.0
  %2056 = vmatpush1.msra.mxu0 0.0
  %2057 = vmatprep.subr.mxu0 0.0
  %2058 = vmatpush1.msra.mxu0 0.0
  %2059 = vmatprep.subr.mxu0 0.0
  %2060 = vmatpush1.msra.mxu0 0.0
  %2061 = vmatprep.subr.mxu0 0.0
  %2062 = vmatpush1.msra.mxu0 0.0
  %2063 = vmatprep.subr.mxu0 0.0
  %2064 = vmatpush1.msra.mxu0 0.0
  %2065 = vmatprep.subr.mxu0 0.0
  %2066 = vmatpush1.msra.mxu0 0.0
  %2067 = vmatprep.subr.mxu0 0.0
  %2068 = vmatpush1.msra.mxu0 0.0
  %2069 = vmatprep.subr.mxu0 0.0
  %2070 = vmatpush1.msra.mxu0 0.0
  %2071 = vmatprep.subr.mxu0 0.0
  %2072 = vmatpush1.msra.mxu0 0.0
  %2073 = vmatprep.mubr.f32.mxu0 0.0
  %2074 = vmatmul.mubr.f32.gmra.mrb[0].mxu0 %v1853
  %v2075 = vpop.f32.mrb[0].mxu0
  %v2076 = vadd.f32 0.0, %v2075
  %v2077 = vpop.f32.mrb[0].mxu0
  %v2078 = vadd.f32 0.0, %v2077
  %2079 = vdwg.mxu0
  %v2080 = vadd.f32 %v1817, %v1934
  %v2081 = vadd.f32 %v1818, %v1936
  %v2082 = vadd.f32 %v1819, %v2005
  %v2083 = vadd.f32 %v1820, %v2007
  %v2084 = vadd.f32 %v1821, %v2076
  %v2085 = vadd.f32 %v1822, %v2078
  %v2086 = vld [vmem:[%s0] sm:$0xff]
  %v2087 = vld [vmem:[%s0 + $0x8] sm:$0xff]
  %v2088 = vld [vmem:[%s0 + $0x10] sm:$0xff]
  %s2089 = scalar_lea.vmem %s1, 64
  %v2090 = vld [vmem:[%s2089] sm:$0xff]
  %v2094 = vcombine.high %v2086, %v2086
  %v2095 = vcombine.high %v2087, %v2087
  %v2096 = vcombine.high %v2088, %v2088
  %2097 = vrot.lane.b32.xlu0 %v2086, 90
  %v2098 = vpop.permute.xlu0 %2097
  %2099 = vrot.lane.b32.xlu0 %v2094, 90
  %v2100 = vpop.permute.xlu0 %2099
  %2101 = vrot.lane.b32.xlu0 %v2087, 90
  %v2102 = vpop.permute.xlu0 %2101
  %2103 = vrot.lane.b32.xlu0 %v2095, 90
  %v2104 = vpop.permute.xlu0 %2103
  %2105 = vrot.lane.b32.xlu0 %v2088, 90
  %v2106 = vpop.permute.xlu0 %2105
  %2107 = vrot.lane.b32.xlu0 %v2096, 90
  %v2108 = vpop.permute.xlu0 %2107
  %vm2109 = vcmask 736256
  %v2110 = vsel %vm2109, %v2098, %v2100
  %v2111 = vsel %vm2109, %v2100, %v2102
  %v2112 = vsel %vm2109, %v2102, %v2104
  %v2113 = vsel %vm2109, %v2104, %v2106
  %v2114 = vsel %vm2109, %v2106, %v2108
  %v2116 = vsel %vm50, %v2090, 0
  %v2118 = vsel %vm54, %v2110, 0
  %v2120 = vsel %vm54, %v2111, 0
  %v2122 = vsel %vm54, %v2112, 0
  %v2124 = vsel %vm54, %v2113, 0
  %v2126 = vsel %vm54, %v2114, 0
  %v2128 = vsel %vm54, %v2108, 0
  %2130 = vmatprep.subr.mxu0 %v2120
  %2131 = vmatpush1.msra.mxu0 %v2118
  %2132 = vmatprep.subr.mxu0 0.0
  %2133 = vmatpush1.msra.mxu0 0.0
  %2134 = vmatprep.subr.mxu0 0.0
  %2135 = vmatpush1.msra.mxu0 0.0
  %2136 = vmatprep.subr.mxu0 0.0
  %2137 = vmatpush1.msra.mxu0 0.0
  %2138 = vmatprep.subr.mxu0 0.0
  %2139 = vmatpush1.msra.mxu0 0.0
  %2140 = vmatprep.subr.mxu0 0.0
  %2141 = vmatpush1.msra.mxu0 0.0
  %2142 = vmatprep.subr.mxu0 0.0
  %2143 = vmatpush1.msra.mxu0 0.0
  %2144 = vmatprep.subr.mxu0 0.0
  %2145 = vmatpush1.msra.mxu0 0.0
  %2146 = vmatprep.subr.mxu0 0.0
  %2147 = vmatpush1.msra.mxu0 0.0
  %2148 = vmatprep.subr.mxu0 0.0
  %2149 = vmatpush1.msra.mxu0 0.0
  %2150 = vmatprep.subr.mxu0 0.0
  %2151 = vmatpush1.msra.mxu0 0.0
  %2152 = vmatprep.subr.mxu0 0.0
  %2153 = vmatpush1.msra.mxu0 0.0
  %2154 = vmatprep.subr.mxu0 0.0
  %2155 = vmatpush1.msra.mxu0 0.0
  %2156 = vmatprep.subr.mxu0 0.0
  %2157 = vmatpush1.msra.mxu0 0.0
  %2158 = vmatprep.subr.mxu0 0.0
  %2159 = vmatpush1.msra.mxu0 0.0
  %2160 = vmatprep.subr.mxu0 0.0
  %2161 = vmatpush1.msra.mxu0 0.0
  %2162 = vmatprep.subr.mxu0 0.0
  %2163 = vmatpush1.msra.mxu0 0.0
  %2164 = vmatprep.subr.mxu0 0.0
  %2165 = vmatpush1.msra.mxu0 0.0
  %2166 = vmatprep.subr.mxu0 0.0
  %2167 = vmatpush1.msra.mxu0 0.0
  %2168 = vmatprep.subr.mxu0 0.0
  %2169 = vmatpush1.msra.mxu0 0.0
  %2170 = vmatprep.subr.mxu0 0.0
  %2171 = vmatpush1.msra.mxu0 0.0
  %2172 = vmatprep.subr.mxu0 0.0
  %2173 = vmatpush1.msra.mxu0 0.0
  %2174 = vmatprep.subr.mxu0 0.0
  %2175 = vmatpush1.msra.mxu0 0.0
  %2176 = vmatprep.subr.mxu0 0.0
  %2177 = vmatpush1.msra.mxu0 0.0
  %2178 = vmatprep.subr.mxu0 0.0
  %2179 = vmatpush1.msra.mxu0 0.0
  %2180 = vmatprep.subr.mxu0 0.0
  %2181 = vmatpush1.msra.mxu0 0.0
  %2182 = vmatprep.subr.mxu0 0.0
  %2183 = vmatpush1.msra.mxu0 0.0
  %2184 = vmatprep.subr.mxu0 0.0
  %2185 = vmatpush1.msra.mxu0 0.0
  %2186 = vmatprep.subr.mxu0 0.0
  %2187 = vmatpush1.msra.mxu0 0.0
  %2188 = vmatprep.subr.mxu0 0.0
  %2189 = vmatpush1.msra.mxu0 0.0
  %2190 = vmatprep.subr.mxu0 0.0
  %2191 = vmatpush1.msra.mxu0 0.0
  %2192 = vmatprep.subr.mxu0 0.0
  %2193 = vmatpush1.msra.mxu0 0.0
  %2194 = vmatprep.mubr.f32.mxu0 0.0
  %2195 = vmatmul.mubr.f32.gmra.mrb[0].mxu0 %v2116
  %v2196 = vpop.f32.mrb[0].mxu0
  %v2197 = vadd.f32 0.0, %v2196
  %v2198 = vpop.f32.mrb[0].mxu0
  %v2199 = vadd.f32 0.0, %v2198
  %2200 = vdwg.mxu0
  %2201 = vmatprep.subr.mxu0 %v2124
  %2202 = vmatpush1.msra.mxu0 %v2122
  %2203 = vmatprep.subr.mxu0 0.0
  %2204 = vmatpush1.msra.mxu0 0.0
  %2205 = vmatprep.subr.mxu0 0.0
  %2206 = vmatpush1.msra.mxu0 0.0
  %2207 = vmatprep.subr.mxu0 0.0
  %2208 = vmatpush1.msra.mxu0 0.0
  %2209 = vmatprep.subr.mxu0 0.0
  %2210 = vmatpush1.msra.mxu0 0.0
  %2211 = vmatprep.subr.mxu0 0.0
  %2212 = vmatpush1.msra.mxu0 0.0
  %2213 = vmatprep.subr.mxu0 0.0
  %2214 = vmatpush1.msra.mxu0 0.0
  %2215 = vmatprep.subr.mxu0 0.0
  %2216 = vmatpush1.msra.mxu0 0.0
  %2217 = vmatprep.subr.mxu0 0.0
  %2218 = vmatpush1.msra.mxu0 0.0
  %2219 = vmatprep.subr.mxu0 0.0
  %2220 = vmatpush1.msra.mxu0 0.0
  %2221 = vmatprep.subr.mxu0 0.0
  %2222 = vmatpush1.msra.mxu0 0.0
  %2223 = vmatprep.subr.mxu0 0.0
  %2224 = vmatpush1.msra.mxu0 0.0
  %2225 = vmatprep.subr.mxu0 0.0
  %2226 = vmatpush1.msra.mxu0 0.0
  %2227 = vmatprep.subr.mxu0 0.0
  %2228 = vmatpush1.msra.mxu0 0.0
  %2229 = vmatprep.subr.mxu0 0.0
  %2230 = vmatpush1.msra.mxu0 0.0
  %2231 = vmatprep.subr.mxu0 0.0
  %2232 = vmatpush1.msra.mxu0 0.0
  %2233 = vmatprep.subr.mxu0 0.0
  %2234 = vmatpush1.msra.mxu0 0.0
  %2235 = vmatprep.subr.mxu0 0.0
  %2236 = vmatpush1.msra.mxu0 0.0
  %2237 = vmatprep.subr.mxu0 0.0
  %2238 = vmatpush1.msra.mxu0 0.0
  %2239 = vmatprep.subr.mxu0 0.0
  %2240 = vmatpush1.msra.mxu0 0.0
  %2241 = vmatprep.subr.mxu0 0.0
  %2242 = vmatpush1.msra.mxu0 0.0
  %2243 = vmatprep.subr.mxu0 0.0
  %2244 = vmatpush1.msra.mxu0 0.0
  %2245 = vmatprep.subr.mxu0 0.0
  %2246 = vmatpush1.msra.mxu0 0.0
  %2247 = vmatprep.subr.mxu0 0.0
  %2248 = vmatpush1.msra.mxu0 0.0
  %2249 = vmatprep.subr.mxu0 0.0
  %2250 = vmatpush1.msra.mxu0 0.0
  %2251 = vmatprep.subr.mxu0 0.0
  %2252 = vmatpush1.msra.mxu0 0.0
  %2253 = vmatprep.subr.mxu0 0.0
  %2254 = vmatpush1.msra.mxu0 0.0
  %2255 = vmatprep.subr.mxu0 0.0
  %2256 = vmatpush1.msra.mxu0 0.0
  %2257 = vmatprep.subr.mxu0 0.0
  %2258 = vmatpush1.msra.mxu0 0.0
  %2259 = vmatprep.subr.mxu0 0.0
  %2260 = vmatpush1.msra.mxu0 0.0
  %2261 = vmatprep.subr.mxu0 0.0
  %2262 = vmatpush1.msra.mxu0 0.0
  %2263 = vmatprep.subr.mxu0 0.0
  %2264 = vmatpush1.msra.mxu0 0.0
  %2265 = vmatprep.mubr.f32.mxu0 0.0
  %2266 = vmatmul.mubr.f32.gmra.mrb[0].mxu0 %v2116
  %v2267 = vpop.f32.mrb[0].mxu0
  %v2268 = vadd.f32 0.0, %v2267
  %v2269 = vpop.f32.mrb[0].mxu0
  %v2270 = vadd.f32 0.0, %v2269
  %2271 = vdwg.mxu0
  %2272 = vmatprep.subr.mxu0 %v2128
  %2273 = vmatpush1.msra.mxu0 %v2126
  %2274 = vmatprep.subr.mxu0 0.0
  %2275 = vmatpush1.msra.mxu0 0.0
  %2276 = vmatprep.subr.mxu0 0.0
  %2277 = vmatpush1.msra.mxu0 0.0
  %2278 = vmatprep.subr.mxu0 0.0
  %2279 = vmatpush1.msra.mxu0 0.0
  %2280 = vmatprep.subr.mxu0 0.0
  %2281 = vmatpush1.msra.mxu0 0.0
  %2282 = vmatprep.subr.mxu0 0.0
  %2283 = vmatpush1.msra.mxu0 0.0
  %2284 = vmatprep.subr.mxu0 0.0
  %2285 = vmatpush1.msra.mxu0 0.0
  %2286 = vmatprep.subr.mxu0 0.0
  %2287 = vmatpush1.msra.mxu0 0.0
  %2288 = vmatprep.subr.mxu0 0.0
  %2289 = vmatpush1.msra.mxu0 0.0
  %2290 = vmatprep.subr.mxu0 0.0
  %2291 = vmatpush1.msra.mxu0 0.0
  %2292 = vmatprep.subr.mxu0 0.0
  %2293 = vmatpush1.msra.mxu0 0.0
  %2294 = vmatprep.subr.mxu0 0.0
  %2295 = vmatpush1.msra.mxu0 0.0
  %2296 = vmatprep.subr.mxu0 0.0
  %2297 = vmatpush1.msra.mxu0 0.0
  %2298 = vmatprep.subr.mxu0 0.0
  %2299 = vmatpush1.msra.mxu0 0.0
  %2300 = vmatprep.subr.mxu0 0.0
  %2301 = vmatpush1.msra.mxu0 0.0
  %2302 = vmatprep.subr.mxu0 0.0
  %2303 = vmatpush1.msra.mxu0 0.0
  %2304 = vmatprep.subr.mxu0 0.0
  %2305 = vmatpush1.msra.mxu0 0.0
  %2306 = vmatprep.subr.mxu0 0.0
  %2307 = vmatpush1.msra.mxu0 0.0
  %2308 = vmatprep.subr.mxu0 0.0
  %2309 = vmatpush1.msra.mxu0 0.0
  %2310 = vmatprep.subr.mxu0 0.0
  %2311 = vmatpush1.msra.mxu0 0.0
  %2312 = vmatprep.subr.mxu0 0.0
  %2313 = vmatpush1.msra.mxu0 0.0
  %2314 = vmatprep.subr.mxu0 0.0
  %2315 = vmatpush1.msra.mxu0 0.0
  %2316 = vmatprep.subr.mxu0 0.0
  %2317 = vmatpush1.msra.mxu0 0.0
  %2318 = vmatprep.subr.mxu0 0.0
  %2319 = vmatpush1.msra.mxu0 0.0
  %2320 = vmatprep.subr.mxu0 0.0
  %2321 = vmatpush1.msra.mxu0 0.0
  %2322 = vmatprep.subr.mxu0 0.0
  %2323 = vmatpush1.msra.mxu0 0.0
  %2324 = vmatprep.subr.mxu0 0.0
  %2325 = vmatpush1.msra.mxu0 0.0
  %2326 = vmatprep.subr.mxu0 0.0
  %2327 = vmatpush1.msra.mxu0 0.0
  %2328 = vmatprep.subr.mxu0 0.0
  %2329 = vmatpush1.msra.mxu0 0.0
  %2330 = vmatprep.subr.mxu0 0.0
  %2331 = vmatpush1.msra.mxu0 0.0
  %2332 = vmatprep.subr.mxu0 0.0
  %2333 = vmatpush1.msra.mxu0 0.0
  %2334 = vmatprep.subr.mxu0 0.0
  %2335 = vmatpush1.msra.mxu0 0.0
  %2336 = vmatprep.mubr.f32.mxu0 0.0
  %2337 = vmatmul.mubr.f32.gmra.mrb[0].mxu0 %v2116
  %v2338 = vpop.f32.mrb[0].mxu0
  %v2339 = vadd.f32 0.0, %v2338
  %v2340 = vpop.f32.mrb[0].mxu0
  %v2341 = vadd.f32 0.0, %v2340
  %2342 = vdwg.mxu0
  %v2343 = vadd.f32 %v2080, %v2197
  %v2344 = vadd.f32 %v2081, %v2199
  %v2345 = vadd.f32 %v2082, %v2268
  %v2346 = vadd.f32 %v2083, %v2270
  %v2347 = vadd.f32 %v2084, %v2339
  %v2348 = vadd.f32 %v2085, %v2341
  %v2349 = vld [vmem:[%s2] sm:$0x3f]
  %v2351 = vlaneseq
  %v2352 = vshrl.u32 %v2351, 7
  %v2353 = vsub.s32 0, %v2352
  %v2354 = vrot.slane %v2349, %v2353
  %v2355 = vlaneseq
  %v2356 = vshrl.u32 %v2355, 7
  %v2357 = vsub.s32 1, %v2356
  %v2358 = vrot.slane %v2349, %v2357
  %v2359 = vlaneseq
  %v2360 = vshrl.u32 %v2359, 7
  %v2361 = vsub.s32 2, %v2360
  %v2362 = vrot.slane %v2349, %v2361
  %v2363 = vlaneseq
  %v2364 = vshrl.u32 %v2363, 7
  %v2365 = vsub.s32 3, %v2364
  %v2366 = vrot.slane %v2349, %v2365
  %v2367 = vlaneseq
  %v2368 = vshrl.u32 %v2367, 7
  %v2369 = vsub.s32 4, %v2368
  %v2370 = vrot.slane %v2349, %v2369
  %v2371 = vlaneseq
  %v2372 = vshrl.u32 %v2371, 7
  %v2373 = vsub.s32 5, %v2372
  %v2374 = vrot.slane %v2349, %v2373
  %v2381 = vmul.f32 %v2343, %v2354
  %v2382 = vmul.f32 %v2344, %v2358
  %v2383 = vmul.f32 %v2345, %v2362
  %v2384 = vmul.f32 %v2346, %v2366
  %v2385 = vmul.f32 %v2347, %v2370
  %v2386 = vmul.f32 %v2348, %v2374
  %v2387 = vadd.f32 %v2381, %v2382
  %v2388 = vadd.f32 %v2387, %v2383
  %v2389 = vadd.f32 %v2388, %v2384
  %v2390 = vadd.f32 %v2389, %v2385
  %vm2391 = vcmask 64512
  %v2392 = vsel %vm2391, %v2386, 0.0
  %v2393 = vadd.f32 %v2390, %v2392
  %2394 = vadd.xlane.f32.xlu0 %v2393
  %v2395 = vpop.xlane.xlu0 %2394
  %v2396 = vmul.f32 %v2395, 0.001953125
  %v2397 = vmul.f32 %v2381, %v2343
  %v2398 = vmul.f32 %v2382, %v2344
  %v2399 = vmul.f32 %v2383, %v2345
  %v2400 = vmul.f32 %v2384, %v2346
  %v2401 = vmul.f32 %v2385, %v2347
  %v2402 = vmul.f32 %v2386, %v2348
  %v2403 = vadd.f32 %v2397, %v2398
  %v2404 = vadd.f32 %v2403, %v2399
  %v2405 = vadd.f32 %v2404, %v2400
  %v2406 = vadd.f32 %v2405, %v2401
  %v2407 = vsel %vm2391, %v2402, 0.0
  %v2408 = vadd.f32 %v2406, %v2407
  %2409 = vadd.xlane.f32.xlu0 %v2408
  %v2410 = vpop.xlane.xlu0 %2409
  %v2411 = vmul.f32 %v2410, 0.001953125
  %v2412 = vmul.f32 %v2396, %v2396
  %v2413 = vsub.f32 %v2411, %v2412
  %v2414 = vadd.f32 %v2413, 1e-05
  %v2415 = vrsqrt.pop %v2414
  %v2416 = vld [vmem:[%s3] sm:$0xff]
  %v2417 = vmul.f32 %v2415, %v2416
  %v2418 = vld [vmem:[%s4] sm:$0xff]
  %v2419 = vmul.f32 %v2396, %v2417
  %v2420 = vsub.f32 %v2418, %v2419
  %2422 = vset.pattern.permute.xlu0 0
  %2423 = vperm.xlu0 %2422, %v2417
  %v2424 = vpop.permute.xlu0 %2423
  %v2426 = vmul.f32 %v2343, %v2424
  %v2427 = vmul.f32 %v2344, %v2424
  %v2428 = vmul.f32 %v2345, %v2424
  %v2429 = vmul.f32 %v2346, %v2424
  %v2430 = vmul.f32 %v2347, %v2424
  %v2431 = vmul.f32 %v2348, %v2424
  %2433 = vset.pattern.permute.xlu0 0
  %2434 = vperm.xlu0 %2433, %v2420
  %v2435 = vpop.permute.xlu0 %2434
  %v2437 = vadd.f32 %v2426, %v2435
  %v2438 = vadd.f32 %v2427, %v2435
  %v2439 = vadd.f32 %v2428, %v2435
  %v2440 = vadd.f32 %v2429, %v2435
  %v2441 = vadd.f32 %v2430, %v2435
  %v2442 = vadd.f32 %v2431, %v2435
  %v2443 = vmul.f32 %v2437, 0.3
  %v2444 = vmul.f32 %v2438, 0.3
  %v2445 = vmul.f32 %v2439, 0.3
  %v2446 = vmul.f32 %v2440, 0.3
  %v2447 = vmul.f32 %v2441, 0.3
  %v2448 = vmul.f32 %v2442, 0.3
  %v2449 = vmax.f32 %v2437, %v2443
  %v2450 = vmax.f32 %v2438, %v2444
  %v2451 = vmax.f32 %v2439, %v2445
  %v2452 = vmax.f32 %v2440, %v2446
  %v2453 = vmax.f32 %v2441, %v2447
  %v2454 = vmax.f32 %v2442, %v2448
  %2455 = vst [vmem:[%s5] sm:$0xff] %v2449
  %2456 = vst [vmem:[%s5 + $0x8] sm:$0xff] %v2450
  %2457 = vst [vmem:[%s5 + $0x10] sm:$0xff] %v2451
  %2458 = vst [vmem:[%s5 + $0x18] sm:$0xff] %v2452
  %2459 = vst [vmem:[%s5 + $0x20] sm:$0xff] %v2453
  %2460 = vst.msk [vmem:[%s5 + $0x28] sm:$0xff] %vm2391, %v2454
  // Predicated region
  $region22: #{conv_block1_forward.1} parent=0 // pred_check
    _
  $region23: #{conv_block1_forward.1} parent=0 // pred_check_branch
    %2462 = sbr.rel (0) target = $region25
  $region24: #{conv_block1_forward.1} parent=0 // pred_region
    _
  $region25: #{conv_block1_forward.1} parent=0 // pred_fallthru
    _
  // Predicated region
  $region26: #{conv_block1_forward.1} parent=0 // pred_check
    _
  $region27: #{conv_block1_forward.1} parent=0 // pred_check_branch
    %2464 = sbr.rel (0) target = $region29
  $region28: #{conv_block1_forward.1} parent=0 // pred_region
    _
  $region29: #{conv_block1_forward.1} parent=0 // pred_fallthru
    _

</llo_original>
